<compile_context>
chip_gen: v7x
topology: tpu7x:2x2x1
jax: 0.10.0
libtpu: 0.0.40
codegen_flags: <defaults>
</compile_context>

<pallas_src>
import functools

import jax
import jax.numpy as jnp
from jax.experimental import pallas as pl
from jax.experimental.pallas import tpu as pltpu

LANE = 128   # TPU lane width (last dim)
SUBLANE = 8  # f32 sublane count (second-to-last dim)


# ----------------------------------------------------------------------------
# Deterministic parameter init (mirrors init_layer / init_bn in the reference)
# ----------------------------------------------------------------------------
def xavier_uniform_t(key, fan_out, fan_in):
    """nn.init.xavier_uniform_ on a torch (fan_out, fan_in) weight, returned
    transposed as (fan_in, fan_out) so kernels compute x @ W."""
    bound = (6.0 / (fan_in + fan_out)) ** 0.5
    w = jax.random.uniform(key, (fan_out, fan_in), jnp.float32, -bound, bound)
    return jnp.asarray(w.T)


def _round_up(n, m):
    return ((n + m - 1) // m) * m


def _pad2d(a, rows, cols):
    if a.shape == (rows, cols):
        return a
    return jnp.pad(a, ((0, rows - a.shape[0]), (0, cols - a.shape[1])))


# ----------------------------------------------------------------------------
# Fused Pallas kernel: synthetic base encoder + Projection head
# ----------------------------------------------------------------------------
def fused_audio_encoder_kernel(d_out, approx_gelu, x_ref, wb_ref, wc_ref, w1_ref,
                               w2_ref, g_ref, b_ref, proj_ref, clip_ref, emb_ref):
    # In-kernel bf16 cast of the activation tile (VPU filler, no wrapper HBM pass).
    x = x_ref[...].astype(jnp.bfloat16)                 # (tb, Lp)

    # ---- synthetic base audio encoder -------------------------------------
    # TODO(synk): the real base network (get_audio_encoder) is not defined in
    # the provided source; this stand-in only reproduces its output contract.
    emb = jnp.dot(x, wb_ref[...], preferred_element_type=jnp.float32)
    emb_ref[...] = emb                                  # embedding (f32 out)
    emb_bf = emb.astype(jnp.bfloat16)                   # f32 emb dies here

    # clipwise head: computed + stored before the projection head starts
    # (shortens live ranges -> fewer spills at large batch tiles).
    logits = jnp.dot(emb_bf, wc_ref[...], preferred_element_type=jnp.float32)
    clip_ref[...] = jax.nn.sigmoid(logits)

    # ---- Projection head ----------------------------------------------------
    # embed1 = linear1(x)            (bias=False)
    e1 = jnp.dot(emb_bf, w1_ref[...], preferred_element_type=jnp.float32)

    if approx_gelu:
        # tanh GELU runs on the EUP slot (free alongside VALU/MXU) -- enable when
        # parity tolerance vs torch's exact erf F.gelu allows it.
        h = jax.nn.gelu(e1, approximate=True)
    else:
        # torch F.gelu default = exact erf-based gelu (kept exact for parity)
        h = 0.5 * e1 * (1.0 + jax.lax.erf(e1 * (2.0 ** -0.5)))

    # embed2 = dropout(linear2(gelu(embed1)))
    e2 = jnp.dot(h.astype(jnp.bfloat16), w2_ref[...],
                 preferred_element_type=jnp.float32)
    # TODO(synk): nn.Dropout(p=0.5) is identity in eval mode; training-mode
    # torch-RNG dropout has no bit-exact Pallas equivalent and is omitted.

    s = e1 + e2

    # LayerNorm over the *true* d_out columns, eps=1e-5, biased variance.
    # Padded columns of w1/w2 (and hence of s) are exactly zero, so both the
    # mean and the E[s^2] sums are already correct -- no iota/where mask needed.
    inv_d = 1.0 / d_out
    mean = jnp.sum(s, axis=-1, keepdims=True) * inv_d
    var = jnp.sum(s * s, axis=-1, keepdims=True) * inv_d - mean * mean
    var = jnp.maximum(var, 0.0)
    normed = (s - mean) * jax.lax.rsqrt(var + 1e-5)
    # padded gamma/beta columns are zero, so padded proj columns are zeroed too.
    proj_ref[...] = normed * g_ref[...] + b_ref[...]


# ----------------------------------------------------------------------------
# Wrapper
# ----------------------------------------------------------------------------
def audio_encoder_forward(x, params, *, block_b=64, approx_gelu=False):
    """Mirrors AudioEncoder.forward: returns (projected_vec, clipwise, out_dict)."""
    B, L = x.shape
    d_in = params["wb"].shape[1]
    n_cls = params["wc"].shape[1]
    d_out = params["w1"].shape[1]

    # lane/sublane-dense padded sizes
    Lp = _round_up(L, LANE)
    d_in_p = _round_up(d_in, LANE)
    n_cls_p = _round_up(n_cls, LANE)
    d_out_p = _round_up(d_out, LANE)

    Bp = _round_up(B, SUBLANE)
    tb = min(block_b, Bp)                       # batch tile per grid step
    if Bp > SUBLANE:
        # keep >= 2 grid steps so the "parallel" batch axis can shard across
        # v7x's two TensorCores (no-op on single-TC v5e/v6e).
        tb = min(tb, max(SUBLANE, _round_up(Bp // 2, SUBLANE)))
    Bp = _round_up(Bp, tb)

    # x stays f32 (bf16 cast happens inside the kernel); pad only when needed.
    xp = _pad2d(x, Bp, Lp)
    # Weights: pad + cast to bf16 MXU feed (one-time, small).
    wb = _pad2d(params["wb"], Lp, d_in_p).astype(jnp.bfloat16)
    wc = _pad2d(params["wc"], d_in_p, n_cls_p).astype(jnp.bfloat16)
    w1 = _pad2d(params["w1"], d_in_p, d_out_p).astype(jnp.bfloat16)
    w2 = _pad2d(params["w2"], d_out_p, d_out_p).astype(jnp.bfloat16)
    gam = _pad2d(params["ln_g"], 1, d_out_p)
    bet = _pad2d(params["ln_b"], 1, d_out_p)

    grid = (Bp // tb,)

    # VMEM budget: single-buffered bf16 weights + double-buffered f32 x / output tiles.
    weight_bytes = 2 * (wb.size + wc.size + w1.size + w2.size) + 4 * (gam.size + bet.size)
    stream_bytes = 2 * tb * 4 * (Lp + d_out_p + n_cls_p + d_in_p)
    vmem_limit = int(min(max(2 * (weight_bytes + stream_bytes), 32 << 20), 64 << 20))

    # Advisory cost estimate so XLA schedules/overlaps the custom call sensibly.
    flops = 2 * Bp * (Lp * d_in_p + d_in_p * n_cls_p
                      + d_in_p * d_out_p + d_out_p * d_out_p)
    bytes_accessed = (xp.size * 4 + weight_bytes
                      + Bp * 4 * (d_out_p + n_cls_p + d_in_p))
    cost = pl.CostEstimate(flops=int(flops),
                           transcendentals=int(Bp * (n_cls_p + d_out_p)),
                           bytes_accessed=int(bytes_accessed))

    kernel = functools.partial(fused_audio_encoder_kernel, d_out, approx_gelu)

    def build_and_call(single_buffer_weights):
        def row_spec(cols):               # tiles that stream over the batch axis
            return pl.BlockSpec((tb, cols), lambda i: (i, 0))

        def const_spec(rows, cols):       # weights: VMEM-resident across grid steps
            if single_buffer_weights:
                return pl.BlockSpec((rows, cols), lambda i: (0, 0),
                                    pipeline_mode=pl.Buffered(1))
            return pl.BlockSpec((rows, cols), lambda i: (0, 0))

        return pl.pallas_call(
            kernel,
            out_shape=(
                jax.ShapeDtypeStruct((Bp, d_out_p), jnp.float32),
                jax.ShapeDtypeStruct((Bp, n_cls_p), jnp.float32),
                jax.ShapeDtypeStruct((Bp, d_in_p), jnp.float32),
            ),
            grid_spec=pltpu.PrefetchScalarGridSpec(
                num_scalar_prefetch=0,
                grid=grid,
                in_specs=[
                    row_spec(Lp),                    # x
                    const_spec(Lp, d_in_p),          # wb
                    const_spec(d_in_p, n_cls_p),     # wc
                    const_spec(d_in_p, d_out_p),     # w1
                    const_spec(d_out_p, d_out_p),    # w2
                    const_spec(1, d_out_p),          # ln gamma
                    const_spec(1, d_out_p),          # ln beta
                ],
                out_specs=(
                    pl.BlockSpec((tb, d_out_p), lambda i: (i, 0)),   # projected
                    pl.BlockSpec((tb, n_cls_p), lambda i: (i, 0)),   # clipwise
                    pl.BlockSpec((tb, d_in_p), lambda i: (i, 0)),    # embedding
                ),
            ),
            compiler_params=pltpu.CompilerParams(
                dimension_semantics=("parallel",),
                vmem_limit_bytes=vmem_limit,
            ),
            cost_estimate=cost,
        )(xp, wb, wc, w1, w2, gam, bet)

    try:
        proj_p, clip_p, emb_p = build_and_call(single_buffer_weights=True)
    except Exception:
        # Fallback for JAX versions without BlockSpec.pipeline_mode support:
        # identical kernel, default double-buffered weights.
        proj_p, clip_p, emb_p = build_and_call(single_buffer_weights=False)

    projected = proj_p[:B, :d_out]
    clipwise = clip_p[:B, :n_cls]
    embedding = emb_p[:B, :d_in]
    out_dict = {"embedding": embedding, "clipwise_output": clipwise}
    return projected, clipwise, out_dict


# ----------------------------------------------------------------------------
# Pure-JAX reference (f32) for a sanity check
# ----------------------------------------------------------------------------
def _reference_forward(x, params):
    emb = x @ params["wb"]
    clip = jax.nn.sigmoid(emb @ params["wc"])
    e1 = emb @ params["w1"]
    h = 0.5 * e1 * (1.0 + jax.lax.erf(e1 * (2.0 ** -0.5)))
    e2 = h @ params["w2"]
    s = e1 + e2
    mean = jnp.mean(s, axis=-1, keepdims=True)
    var = jnp.mean((s - mean) ** 2, axis=-1, keepdims=True)
    proj = (s - mean) * jax.lax.rsqrt(var + 1e-5) * params["ln_g"] + params["ln_b"]
    return proj, clip, emb


# ----------------------------------------------------------------------------
# Main
# ----------------------------------------------------------------------------
if __name__ == "__main__":
    B = 2          # batch
    L = 64         # raw audio / feature length fed to the base encoder
    d_in = 32      # base embedding dim (Projection d_in)
    d_out = 32     # projection output dim
    n_cls = 16     # clipwise classification heads

    key = jax.random.PRNGKey(0)
    k_x, k_wb, k_wc, k_w1, k_w2 = jax.random.split(key, 5)

    x = jax.random.normal(k_x, (B, L), jnp.float32)

    params = {
        # synthetic base encoder weights
        "wb": xavier_uniform_t(k_wb, d_in, L),       # (L, d_in)
        "wc": xavier_uniform_t(k_wc, n_cls, d_in),   # (d_in, n_cls)
        # Projection: linear1 (d_out, d_in), linear2 (d_out, d_out), xavier init
        "w1": xavier_uniform_t(k_w1, d_out, d_in),   # (d_in, d_out)
        "w2": xavier_uniform_t(k_w2, d_out, d_out),  # (d_out, d_out)
        # LayerNorm: init_bn -> weight=1, bias=0 (kept as (1, d_out) rows)
        "ln_g": jnp.ones((1, d_out), jnp.float32),
        "ln_b": jnp.zeros((1, d_out), jnp.float32),
    }

    projected_vec, clipwise_out, out_dict = audio_encoder_forward(x, params)
    jax.block_until_ready((projected_vec, clipwise_out, out_dict))

    assert projected_vec.shape == (B, d_out)
    assert clipwise_out.shape == (B, n_cls)
    assert out_dict["embedding"].shape == (B, d_in)

    # loose sanity check vs. f32 reference (kernel feeds the MXU bf16)
    ref_proj, ref_clip, ref_emb = _reference_forward(x, params)
    assert bool(jnp.allclose(out_dict["embedding"], ref_emb, atol=5e-2, rtol=5e-2))
    assert bool(jnp.allclose(clipwise_out, ref_clip, atol=5e-2, rtol=5e-2))
    assert bool(jnp.allclose(projected_vec, ref_proj, atol=1e-1, rtol=1e-1))

    print("KERNEL_OK")
</pallas_src>

<mosaic_0001>
module attributes {stable_mosaic.version = 11 : i64} {
  func.func @fused_audio_encoder_kernel(%arg0: i32, %arg1: memref<8x128xf32, #tpu.memory_space<vmem>>, %arg2: memref<128x128xbf16, #tpu.memory_space<vmem>>, %arg3: memref<128x128xbf16, #tpu.memory_space<vmem>>, %arg4: memref<128x128xbf16, #tpu.memory_space<vmem>>, %arg5: memref<128x128xbf16, #tpu.memory_space<vmem>>, %arg6: memref<1x128xf32, #tpu.memory_space<vmem>>, %arg7: memref<1x128xf32, #tpu.memory_space<vmem>>, %arg8: memref<8x128xf32, #tpu.memory_space<vmem>>, %arg9: memref<8x128xf32, #tpu.memory_space<vmem>>, %arg10: memref<8x128xf32, #tpu.memory_space<vmem>>) attributes {dimension_semantics = [#tpu.dimension_semantics<parallel>], iteration_bounds = array<i64: 1>, scalar_prefetch = 0 : i64, scratch_operands = 0 : i64, tpu.core_type = #tpu.core_type<tc>, window_params = [{transform_indices = @transform_0, window_bounds = array<i64: 8, 128>}, {pipeline_mode = #tpu.pipeline_mode<synchronous>, transform_indices = @transform_1, window_bounds = array<i64: 128, 128>}, {pipeline_mode = #tpu.pipeline_mode<synchronous>, transform_indices = @transform_2, window_bounds = array<i64: 128, 128>}, {pipeline_mode = #tpu.pipeline_mode<synchronous>, transform_indices = @transform_3, window_bounds = array<i64: 128, 128>}, {pipeline_mode = #tpu.pipeline_mode<synchronous>, transform_indices = @transform_4, window_bounds = array<i64: 128, 128>}, {pipeline_mode = #tpu.pipeline_mode<synchronous>, transform_indices = @transform_5, window_bounds = array<i64: 1, 128>}, {pipeline_mode = #tpu.pipeline_mode<synchronous>, transform_indices = @transform_6, window_bounds = array<i64: 1, 128>}, {transform_indices = @transform_7, window_bounds = array<i64: 8, 128>}, {transform_indices = @transform_8, window_bounds = array<i64: 8, 128>}, {transform_indices = @transform_9, window_bounds = array<i64: 8, 128>}]} {
    %c0 = arith.constant 0 : index
    %c0_0 = arith.constant 0 : index
    %0 = vector.load %arg1[%c0, %c0_0] : memref<8x128xf32, #tpu.memory_space<vmem>>, vector<8x128xf32>
    %1 = arith.truncf %0 : vector<8x128xf32> to vector<8x128xbf16>
    %c0_1 = arith.constant 0 : index
    %c0_2 = arith.constant 0 : index
    %2 = vector.load %arg2[%c0_1, %c0_2] : memref<128x128xbf16, #tpu.memory_space<vmem>>, vector<128x128xbf16>
    %cst = arith.constant dense<0.000000e+00> : vector<8x128xf32>
    %3 = tpu.matmul %1, %2, %cst {dimension_numbers = #tpu.dot_dimension_numbers<[1], [0], [0], [1], [0, 0, 1, 1], [], []>} : vector<8x128xbf16>, vector<128x128xbf16>, vector<8x128xf32> -> vector<8x128xf32>
    %c0_3 = arith.constant 0 : index
    %c0_4 = arith.constant 0 : index
    %4 = vector.load %arg10[%c0_3, %c0_4] : memref<8x128xf32, #tpu.memory_space<vmem>>, vector<8x128xf32>
    tpu.vector_store %arg10[%c0_3, %c0_4], %3 {strides = array<i32>} : memref<8x128xf32, #tpu.memory_space<vmem>>, vector<8x128xf32>,
    %5 = arith.truncf %3 : vector<8x128xf32> to vector<8x128xbf16>
    %c0_5 = arith.constant 0 : index
    %c0_6 = arith.constant 0 : index
    %6 = vector.load %arg3[%c0_5, %c0_6] : memref<128x128xbf16, #tpu.memory_space<vmem>>, vector<128x128xbf16>
    %cst_7 = arith.constant dense<0.000000e+00> : vector<8x128xf32>
    %7 = tpu.matmul %5, %6, %cst_7 {dimension_numbers = #tpu.dot_dimension_numbers<[1], [0], [0], [1], [0, 0, 1, 1], [], []>} : vector<8x128xbf16>, vector<128x128xbf16>, vector<8x128xf32> -> vector<8x128xf32>
    %8 = arith.negf %7 : vector<8x128xf32>
    %9 = math.exp %8 : vector<8x128xf32>
    %cst_8 = arith.constant 1.000000e+00 : f32
    %10 = vector.broadcast %cst_8 : f32 to vector<8x128xf32>
    %11 = arith.addf %10, %9 : vector<8x128xf32>
    %12 = arith.divf %10, %11 : vector<8x128xf32>
    %c0_9 = arith.constant 0 : index
    %c0_10 = arith.constant 0 : index
    %13 = vector.load %arg9[%c0_9, %c0_10] : memref<8x128xf32, #tpu.memory_space<vmem>>, vector<8x128xf32>
    tpu.vector_store %arg9[%c0_9, %c0_10], %12 {strides = array<i32>} : memref<8x128xf32, #tpu.memory_space<vmem>>, vector<8x128xf32>,
    %c0_11 = arith.constant 0 : index
    %c0_12 = arith.constant 0 : index
    %14 = vector.load %arg4[%c0_11, %c0_12] : memref<128x128xbf16, #tpu.memory_space<vmem>>, vector<128x128xbf16>
    %cst_13 = arith.constant dense<0.000000e+00> : vector<8x128xf32>
    %15 = tpu.matmul %5, %14, %cst_13 {dimension_numbers = #tpu.dot_dimension_numbers<[1], [0], [0], [1], [0, 0, 1, 1], [], []>} : vector<8x128xbf16>, vector<128x128xbf16>, vector<8x128xf32> -> vector<8x128xf32>
    %cst_14 = arith.constant 5.000000e-01 : f32
    %16 = vector.broadcast %cst_14 : f32 to vector<8x128xf32>
    %17 = arith.mulf %16, %15 : vector<8x128xf32>
    %cst_15 = arith.constant 0.707106769 : f32
    %18 = vector.broadcast %cst_15 : f32 to vector<8x128xf32>
    %19 = arith.mulf %15, %18 : vector<8x128xf32>
    %20 = math.erf %19 : vector<8x128xf32>
    %cst_16 = arith.constant 1.000000e+00 : f32
    %21 = vector.broadcast %cst_16 : f32 to vector<8x128xf32>
    %22 = arith.addf %21, %20 : vector<8x128xf32>
    %23 = arith.mulf %17, %22 : vector<8x128xf32>
    %24 = arith.truncf %23 : vector<8x128xf32> to vector<8x128xbf16>
    %c0_17 = arith.constant 0 : index
    %c0_18 = arith.constant 0 : index
    %25 = vector.load %arg5[%c0_17, %c0_18] : memref<128x128xbf16, #tpu.memory_space<vmem>>, vector<128x128xbf16>
    %cst_19 = arith.constant dense<0.000000e+00> : vector<8x128xf32>
    %26 = tpu.matmul %24, %25, %cst_19 {dimension_numbers = #tpu.dot_dimension_numbers<[1], [0], [0], [1], [0, 0, 1, 1], [], []>} : vector<8x128xbf16>, vector<128x128xbf16>, vector<8x128xf32> -> vector<8x128xf32>
    %27 = arith.addf %15, %26 : vector<8x128xf32>
    %cst_20 = arith.constant dense<0.000000e+00> : vector<8xf32>
    %28 = vector.multi_reduction <add>, %27, %cst_20 [1] : vector<8x128xf32> to vector<8xf32>
    %29 = vector.shape_cast %28 : vector<8xf32> to vector<8x1xf32>
    %cst_21 = arith.constant 3.125000e-02 : f32
    %30 = vector.broadcast %cst_21 : f32 to vector<8x1xf32>
    %31 = arith.mulf %29, %30 : vector<8x1xf32>
    %32 = arith.mulf %27, %27 : vector<8x128xf32>
    %cst_22 = arith.constant dense<0.000000e+00> : vector<8xf32>
    %33 = vector.multi_reduction <add>, %32, %cst_22 [1] : vector<8x128xf32> to vector<8xf32>
    %34 = vector.shape_cast %33 : vector<8xf32> to vector<8x1xf32>
    %cst_23 = arith.constant 3.125000e-02 : f32
    %35 = vector.broadcast %cst_23 : f32 to vector<8x1xf32>
    %36 = arith.mulf %34, %35 : vector<8x1xf32>
    %37 = arith.mulf %31, %31 : vector<8x1xf32>
    %38 = arith.subf %36, %37 : vector<8x1xf32>
    %cst_24 = arith.constant 0.000000e+00 : f32
    %39 = vector.broadcast %cst_24 : f32 to vector<8x1xf32>
    %40 = arith.maximumf %38, %39 : vector<8x1xf32>
    %41 = vector.broadcast %31 : vector<8x1xf32> to vector<8x128xf32>
    %42 = arith.subf %27, %41 : vector<8x128xf32>
    %cst_25 = arith.constant 9.99999974E-6 : f32
    %43 = vector.broadcast %cst_25 : f32 to vector<8x1xf32>
    %44 = arith.addf %40, %43 : vector<8x1xf32>
    %45 = math.rsqrt %44 : vector<8x1xf32>
    %46 = vector.broadcast %45 : vector<8x1xf32> to vector<8x128xf32>
    %47 = arith.mulf %42, %46 : vector<8x128xf32>
    %c0_26 = arith.constant 0 : index
    %c0_27 = arith.constant 0 : index
    %48 = vector.load %arg6[%c0_26, %c0_27] : memref<1x128xf32, #tpu.memory_space<vmem>>, vector<1x128xf32>
    %49 = vector.broadcast %48 : vector<1x128xf32> to vector<8x128xf32>
    %50 = arith.mulf %47, %49 : vector<8x128xf32>
    %c0_28 = arith.constant 0 : index
    %c0_29 = arith.constant 0 : index
    %51 = vector.load %arg7[%c0_28, %c0_29] : memref<1x128xf32, #tpu.memory_space<vmem>>, vector<1x128xf32>
    %52 = vector.broadcast %51 : vector<1x128xf32> to vector<8x128xf32>
    %53 = arith.addf %50, %52 : vector<8x128xf32>
    %c0_30 = arith.constant 0 : index
    %c0_31 = arith.constant 0 : index
    %54 = vector.load %arg8[%c0_30, %c0_31] : memref<8x128xf32, #tpu.memory_space<vmem>>, vector<8x128xf32>
    tpu.vector_store %arg8[%c0_30, %c0_31], %53 {strides = array<i32>} : memref<8x128xf32, #tpu.memory_space<vmem>>, vector<8x128xf32>,
    return
  }
  func.func @transform_0(%arg0: i32) -> (i32, i32) {
    %c0_i32 = arith.constant 0 : i32
    %c0_i32_0 = arith.constant 0 : i32
    return %arg0, %c0_i32 : i32, i32
  }
  func.func @transform_1(%arg0: i32) -> (i32, i32) {
    %c0_i32 = arith.constant 0 : i32
    %c0_i32_0 = arith.constant 0 : i32
    %c0_i32_1 = arith.constant 0 : i32
    return %c0_i32, %c0_i32_0 : i32, i32
  }
  func.func @transform_2(%arg0: i32) -> (i32, i32) {
    %c0_i32 = arith.constant 0 : i32
    %c0_i32_0 = arith.constant 0 : i32
    %c0_i32_1 = arith.constant 0 : i32
    return %c0_i32, %c0_i32_0 : i32, i32
  }
  func.func @transform_3(%arg0: i32) -> (i32, i32) {
    %c0_i32 = arith.constant 0 : i32
    %c0_i32_0 = arith.constant 0 : i32
    %c0_i32_1 = arith.constant 0 : i32
    return %c0_i32, %c0_i32_0 : i32, i32
  }
  func.func @transform_4(%arg0: i32) -> (i32, i32) {
    %c0_i32 = arith.constant 0 : i32
    %c0_i32_0 = arith.constant 0 : i32
    %c0_i32_1 = arith.constant 0 : i32
    return %c0_i32, %c0_i32_0 : i32, i32
  }
  func.func @transform_5(%arg0: i32) -> (i32, i32) {
    %c0_i32 = arith.constant 0 : i32
    %c0_i32_0 = arith.constant 0 : i32
    %c0_i32_1 = arith.constant 0 : i32
    return %c0_i32, %c0_i32_0 : i32, i32
  }
  func.func @transform_6(%arg0: i32) -> (i32, i32) {
    %c0_i32 = arith.constant 0 : i32
    %c0_i32_0 = arith.constant 0 : i32
    %c0_i32_1 = arith.constant 0 : i32
    return %c0_i32, %c0_i32_0 : i32, i32
  }
  func.func @transform_7(%arg0: i32) -> (i32, i32) {
    %c0_i32 = arith.constant 0 : i32
    %c0_i32_0 = arith.constant 0 : i32
    return %arg0, %c0_i32 : i32, i32
  }
  func.func @transform_8(%arg0: i32) -> (i32, i32) {
    %c0_i32 = arith.constant 0 : i32
    %c0_i32_0 = arith.constant 0 : i32
    return %arg0, %c0_i32 : i32, i32
  }
  func.func @transform_9(%arg0: i32) -> (i32, i32) {
    %c0_i32 = arith.constant 0 : i32
    %c0_i32_0 = arith.constant 0 : i32
    return %arg0, %c0_i32 : i32, i32
  }
}

module attributes {stable_mosaic.version = 11 : i64} {
  func.func @fused_audio_encoder_kernel(%arg0: i32, %arg1: memref<8x128xf32, #tpu.memory_space<vmem>>, %arg2: memref<128x128xbf16, #tpu.memory_space<vmem>>, %arg3: memref<128x128xbf16, #tpu.memory_space<vmem>>, %arg4: memref<128x128xbf16, #tpu.memory_space<vmem>>, %arg5: memref<128x128xbf16, #tpu.memory_space<vmem>>, %arg6: memref<1x128xf32, #tpu.memory_space<vmem>>, %arg7: memref<1x128xf32, #tpu.memory_space<vmem>>, %arg8: memref<8x128xf32, #tpu.memory_space<vmem>>, %arg9: memref<8x128xf32, #tpu.memory_space<vmem>>, %arg10: memref<8x128xf32, #tpu.memory_space<vmem>>) attributes {dimension_semantics = [#tpu.dimension_semantics<parallel>], iteration_bounds = array<i64: 1>, scalar_prefetch = 0 : i64, scratch_operands = 0 : i64, tpu.core_type = #tpu.core_type<tc>, window_params = [{transform_indices = @transform_0, window_bounds = array<i64: 8, 128>}, {pipeline_mode = #tpu.pipeline_mode<synchronous>, transform_indices = @transform_1, window_bounds = array<i64: 128, 128>}, {pipeline_mode = #tpu.pipeline_mode<synchronous>, transform_indices = @transform_2, window_bounds = array<i64: 128, 128>}, {pipeline_mode = #tpu.pipeline_mode<synchronous>, transform_indices = @transform_3, window_bounds = array<i64: 128, 128>}, {pipeline_mode = #tpu.pipeline_mode<synchronous>, transform_indices = @transform_4, window_bounds = array<i64: 128, 128>}, {pipeline_mode = #tpu.pipeline_mode<synchronous>, transform_indices = @transform_5, window_bounds = array<i64: 1, 128>}, {pipeline_mode = #tpu.pipeline_mode<synchronous>, transform_indices = @transform_6, window_bounds = array<i64: 1, 128>}, {transform_indices = @transform_7, window_bounds = array<i64: 8, 128>}, {transform_indices = @transform_8, window_bounds = array<i64: 8, 128>}, {transform_indices = @transform_9, window_bounds = array<i64: 8, 128>}]} {
    %c0 = arith.constant 0 : index
    %c0_0 = arith.constant 0 : index
    %0 = vector.load %arg1[%c0, %c0_0] : memref<8x128xf32, #tpu.memory_space<vmem>>, vector<8x128xf32>
    %1 = arith.truncf %0 : vector<8x128xf32> to vector<8x128xbf16>
    %c0_1 = arith.constant 0 : index
    %c0_2 = arith.constant 0 : index
    %2 = vector.load %arg2[%c0_1, %c0_2] : memref<128x128xbf16, #tpu.memory_space<vmem>>, vector<128x128xbf16>
    %cst = arith.constant dense<0.000000e+00> : vector<8x128xf32>
    %3 = tpu.matmul %1, %2, %cst {dimension_numbers = #tpu.dot_dimension_numbers<[1], [0], [0], [1], [0, 0, 1, 1], [], []>} : vector<8x128xbf16>, vector<128x128xbf16>, vector<8x128xf32> -> vector<8x128xf32>
    %c0_3 = arith.constant 0 : index
    %c0_4 = arith.constant 0 : index
    %4 = vector.load %arg10[%c0_3, %c0_4] : memref<8x128xf32, #tpu.memory_space<vmem>>, vector<8x128xf32>
    tpu.vector_store %arg10[%c0_3, %c0_4], %3 {strides = array<i32>} : memref<8x128xf32, #tpu.memory_space<vmem>>, vector<8x128xf32>,
    %5 = arith.truncf %3 : vector<8x128xf32> to vector<8x128xbf16>
    %c0_5 = arith.constant 0 : index
    %c0_6 = arith.constant 0 : index
    %6 = vector.load %arg3[%c0_5, %c0_6] : memref<128x128xbf16, #tpu.memory_space<vmem>>, vector<128x128xbf16>
    %cst_7 = arith.constant dense<0.000000e+00> : vector<8x128xf32>
    %7 = tpu.matmul %5, %6, %cst_7 {dimension_numbers = #tpu.dot_dimension_numbers<[1], [0], [0], [1], [0, 0, 1, 1], [], []>} : vector<8x128xbf16>, vector<128x128xbf16>, vector<8x128xf32> -> vector<8x128xf32>
    %8 = arith.negf %7 : vector<8x128xf32>
    %9 = math.exp %8 : vector<8x128xf32>
    %cst_8 = arith.constant 1.000000e+00 : f32
    %10 = vector.broadcast %cst_8 : f32 to vector<8x128xf32>
    %11 = arith.addf %10, %9 : vector<8x128xf32>
    %12 = arith.divf %10, %11 : vector<8x128xf32>
    %c0_9 = arith.constant 0 : index
    %c0_10 = arith.constant 0 : index
    %13 = vector.load %arg9[%c0_9, %c0_10] : memref<8x128xf32, #tpu.memory_space<vmem>>, vector<8x128xf32>
    tpu.vector_store %arg9[%c0_9, %c0_10], %12 {strides = array<i32>} : memref<8x128xf32, #tpu.memory_space<vmem>>, vector<8x128xf32>,
    %c0_11 = arith.constant 0 : index
    %c0_12 = arith.constant 0 : index
    %14 = vector.load %arg4[%c0_11, %c0_12] : memref<128x128xbf16, #tpu.memory_space<vmem>>, vector<128x128xbf16>
    %cst_13 = arith.constant dense<0.000000e+00> : vector<8x128xf32>
    %15 = tpu.matmul %5, %14, %cst_13 {dimension_numbers = #tpu.dot_dimension_numbers<[1], [0], [0], [1], [0, 0, 1, 1], [], []>} : vector<8x128xbf16>, vector<128x128xbf16>, vector<8x128xf32> -> vector<8x128xf32>
    %cst_14 = arith.constant 5.000000e-01 : f32
    %16 = vector.broadcast %cst_14 : f32 to vector<8x128xf32>
    %17 = arith.mulf %16, %15 : vector<8x128xf32>
    %cst_15 = arith.constant 0.707106769 : f32
    %18 = vector.broadcast %cst_15 : f32 to vector<8x128xf32>
    %19 = arith.mulf %15, %18 : vector<8x128xf32>
    %20 = math.erf %19 : vector<8x128xf32>
    %cst_16 = arith.constant 1.000000e+00 : f32
    %21 = vector.broadcast %cst_16 : f32 to vector<8x128xf32>
    %22 = arith.addf %21, %20 : vector<8x128xf32>
    %23 = arith.mulf %17, %22 : vector<8x128xf32>
    %24 = arith.truncf %23 : vector<8x128xf32> to vector<8x128xbf16>
    %c0_17 = arith.constant 0 : index
    %c0_18 = arith.constant 0 : index
    %25 = vector.load %arg5[%c0_17, %c0_18] : memref<128x128xbf16, #tpu.memory_space<vmem>>, vector<128x128xbf16>
    %cst_19 = arith.constant dense<0.000000e+00> : vector<8x128xf32>
    %26 = tpu.matmul %24, %25, %cst_19 {dimension_numbers = #tpu.dot_dimension_numbers<[1], [0], [0], [1], [0, 0, 1, 1], [], []>} : vector<8x128xbf16>, vector<128x128xbf16>, vector<8x128xf32> -> vector<8x128xf32>
    %27 = arith.addf %15, %26 : vector<8x128xf32>
    %cst_20 = arith.constant dense<0.000000e+00> : vector<8xf32>
    %28 = vector.multi_reduction <add>, %27, %cst_20 [1] : vector<8x128xf32> to vector<8xf32>
    %29 = vector.shape_cast %28 : vector<8xf32> to vector<8x1xf32>
    %cst_21 = arith.constant 3.125000e-02 : f32
    %30 = vector.broadcast %cst_21 : f32 to vector<8x1xf32>
    %31 = arith.mulf %29, %30 : vector<8x1xf32>
    %32 = arith.mulf %27, %27 : vector<8x128xf32>
    %cst_22 = arith.constant dense<0.000000e+00> : vector<8xf32>
    %33 = vector.multi_reduction <add>, %32, %cst_22 [1] : vector<8x128xf32> to vector<8xf32>
    %34 = vector.shape_cast %33 : vector<8xf32> to vector<8x1xf32>
    %cst_23 = arith.constant 3.125000e-02 : f32
    %35 = vector.broadcast %cst_23 : f32 to vector<8x1xf32>
    %36 = arith.mulf %34, %35 : vector<8x1xf32>
    %37 = arith.mulf %31, %31 : vector<8x1xf32>
    %38 = arith.subf %36, %37 : vector<8x1xf32>
    %cst_24 = arith.constant 0.000000e+00 : f32
    %39 = vector.broadcast %cst_24 : f32 to vector<8x1xf32>
    %40 = arith.maximumf %38, %39 : vector<8x1xf32>
    %41 = vector.broadcast %31 : vector<8x1xf32> to vector<8x128xf32>
    %42 = arith.subf %27, %41 : vector<8x128xf32>
    %cst_25 = arith.constant 9.99999974E-6 : f32
    %43 = vector.broadcast %cst_25 : f32 to vector<8x1xf32>
    %44 = arith.addf %40, %43 : vector<8x1xf32>
    %45 = math.rsqrt %44 : vector<8x1xf32>
    %46 = vector.broadcast %45 : vector<8x1xf32> to vector<8x128xf32>
    %47 = arith.mulf %42, %46 : vector<8x128xf32>
    %c0_26 = arith.constant 0 : index
    %c0_27 = arith.constant 0 : index
    %48 = vector.load %arg6[%c0_26, %c0_27] : memref<1x128xf32, #tpu.memory_space<vmem>>, vector<1x128xf32>
    %49 = vector.broadcast %48 : vector<1x128xf32> to vector<8x128xf32>
    %50 = arith.mulf %47, %49 : vector<8x128xf32>
    %c0_28 = arith.constant 0 : index
    %c0_29 = arith.constant 0 : index
    %51 = vector.load %arg7[%c0_28, %c0_29] : memref<1x128xf32, #tpu.memory_space<vmem>>, vector<1x128xf32>
    %52 = vector.broadcast %51 : vector<1x128xf32> to vector<8x128xf32>
    %53 = arith.addf %50, %52 : vector<8x128xf32>
    %c0_30 = arith.constant 0 : index
    %c0_31 = arith.constant 0 : index
    %54 = vector.load %arg8[%c0_30, %c0_31] : memref<8x128xf32, #tpu.memory_space<vmem>>, vector<8x128xf32>
    tpu.vector_store %arg8[%c0_30, %c0_31], %53 {strides = array<i32>} : memref<8x128xf32, #tpu.memory_space<vmem>>, vector<8x128xf32>,
    return
  }
  func.func @transform_0(%arg0: i32) -> (i32, i32) {
    %c0_i32 = arith.constant 0 : i32
    %c0_i32_0 = arith.constant 0 : i32
    return %arg0, %c0_i32 : i32, i32
  }
  func.func @transform_1(%arg0: i32) -> (i32, i32) {
    %c0_i32 = arith.constant 0 : i32
    %c0_i32_0 = arith.constant 0 : i32
    %c0_i32_1 = arith.constant 0 : i32
    return %c0_i32, %c0_i32_0 : i32, i32
  }
  func.func @transform_2(%arg0: i32) -> (i32, i32) {
    %c0_i32 = arith.constant 0 : i32
    %c0_i32_0 = arith.constant 0 : i32
    %c0_i32_1 = arith.constant 0 : i32
    return %c0_i32, %c0_i32_0 : i32, i32
  }
  func.func @transform_3(%arg0: i32) -> (i32, i32) {
    %c0_i32 = arith.constant 0 : i32
    %c0_i32_0 = arith.constant 0 : i32
    %c0_i32_1 = arith.constant 0 : i32
    return %c0_i32, %c0_i32_0 : i32, i32
  }
  func.func @transform_4(%arg0: i32) -> (i32, i32) {
    %c0_i32 = arith.constant 0 : i32
    %c0_i32_0 = arith.constant 0 : i32
    %c0_i32_1 = arith.constant 0 : i32
    return %c0_i32, %c0_i32_0 : i32, i32
  }
  func.func @transform_5(%arg0: i32) -> (i32, i32) {
    %c0_i32 = arith.constant 0 : i32
    %c0_i32_0 = arith.constant 0 : i32
    %c0_i32_1 = arith.constant 0 : i32
    return %c0_i32, %c0_i32_0 : i32, i32
  }
  func.func @transform_6(%arg0: i32) -> (i32, i32) {
    %c0_i32 = arith.constant 0 : i32
    %c0_i32_0 = arith.constant 0 : i32
    %c0_i32_1 = arith.constant 0 : i32
    return %c0_i32, %c0_i32_0 : i32, i32
  }
  func.func @transform_7(%arg0: i32) -> (i32, i32) {
    %c0_i32 = arith.constant 0 : i32
    %c0_i32_0 = arith.constant 0 : i32
    return %arg0, %c0_i32 : i32, i32
  }
  func.func @transform_8(%arg0: i32) -> (i32, i32) {
    %c0_i32 = arith.constant 0 : i32
    %c0_i32_0 = arith.constant 0 : i32
    return %arg0, %c0_i32 : i32, i32
  }
  func.func @transform_9(%arg0: i32) -> (i32, i32) {
    %c0_i32 = arith.constant 0 : i32
    %c0_i32_0 = arith.constant 0 : i32
    return %arg0, %c0_i32 : i32, i32
  }
}

</mosaic_0001>

<llo_original>
// kernel: tpu_custom_call.1
$region0: #{tpu_custom_call.1}
  #allocation0 [shape = 'u32[]', space=smem, size = 0x4, offset = 0x4, fixed_abs, tag = 'smem constant byte address 0x4 - core index']
  #allocation1 [shape = 'u32[144,128]{1,0:T(1,128)}', space=vmem, size = 0x12000, scoped, tag = 'internal scratch']
  %s0 = inlined_call_operand.hbm [shape: f32[8,128], index: 0, kind: input, shape index: {}]
  %s1 = inlined_call_operand.hbm [shape: bf16[128,128], index: 1, kind: input, shape index: {}]
  %s2 = inlined_call_operand.hbm [shape: bf16[128,128], index: 2, kind: input, shape index: {}]
  %s3 = inlined_call_operand.hbm [shape: bf16[128,128], index: 3, kind: input, shape index: {}]
  %s4 = inlined_call_operand.hbm [shape: bf16[128,128], index: 4, kind: input, shape index: {}]
  %s5 = inlined_call_operand.vmem [shape: f32[1,128], index: 5, kind: input, shape index: {}]
  %s6 = inlined_call_operand.vmem [shape: f32[1,128], index: 6, kind: input, shape index: {}]
  %s7 = inlined_call_operand.hbm [shape: f32[8,128], index: 7, kind: output, shape index: {0}]
  %s8 = inlined_call_operand.hbm [shape: f32[8,128], index: 8, kind: output, shape index: {1}]
  %s9 = inlined_call_operand.hbm [shape: f32[8,128], index: 9, kind: output, shape index: {2}]
  %10 = xla_tuple %s7, %s8, %s9
  %s11 = sld [smem:[#allocation0]]
  $region74: #{tpu_custom_call.1} parent=0
    _
  %s13 = ssub.s32 1, %s11
  %s14 = scalar_select 0, %s13, %s11
  $region1: #{tpu_custom_call.1} parent=0
    #allocation2 [shape = 'u8[4096]{0}', space=vmem, size = 0x1000, scoped, tag = 'input window, operand 0, single buffered']
    #allocation3 [shape = 's32[1]{0}', space=sflag, size = 0x4, scoped, tag = 'scoped memory for tpu_custom_call.1']
    #allocation4 [shape = 's32[1]{0}', space=sflag, size = 0x4, scoped, tag = 'scoped memory for tpu_custom_call.1']
    #allocation5 [shape = 'u8[32768]{0}', space=vmem, size = 0x8000, scoped, tag = 'input window, operand 1, single buffered']
    #allocation6 [shape = 's32[1]{0}', space=sflag, size = 0x4, scoped, tag = 'scoped memory for tpu_custom_call.1']
    #allocation7 [shape = 'u8[32768]{0}', space=vmem, size = 0x8000, scoped, tag = 'input window, operand 2, single buffered']
    #allocation8 [shape = 'u8[32768]{0}', space=vmem, size = 0x8000, scoped, tag = 'input window, operand 3, single buffered']
    #allocation9 [shape = 's32[1]{0}', space=sflag, size = 0x4, scoped, tag = 'scoped memory for tpu_custom_call.1']
    #allocation10 [shape = 'u8[32768]{0}', space=vmem, size = 0x8000, scoped, tag = 'input window, operand 4, single buffered']
    #allocation11 [shape = 'u8[4096]{0}', space=vmem, size = 0x1000, scoped, tag = 'output window, operand 0, single buffered']
    #allocation12 [shape = 'u8[4096]{0}', space=vmem, size = 0x1000, scoped, tag = 'output window, operand 1, single buffered']
    #allocation13 [shape = 's32[1]{0}', space=sflag, size = 0x4, scoped, tag = 'scoped memory for tpu_custom_call.1']
    #allocation14 [shape = 'u8[4096]{0}', space=vmem, size = 0x1000, scoped, tag = 'output window, operand 2, single buffered']
    %15 = vsyncpa [#allocation3], 0
    %16 = vsyncpa [#allocation6], 0
    %17 = vsyncpa [#allocation9], 0
    %18 = vsyncpa [#allocation4], 0
    %19 = vsyncpa [#allocation13], 0
    // Predicated region
    $region2: #{tpu_custom_call.1} parent=1 // pred_check
      _
    $region3: #{tpu_custom_call.1} parent=1 // pred_check_branch
      %21 = sbr.rel (0) target = $region5
    $region4: #{tpu_custom_call.1} parent=1 // pred_region
      %s23 = ssub.s32 128, 128
      %24 = vsyncadd [#allocation3], %s23
      %s26 = sshll.u32 [#allocation2], 4
      %s27 = int_to_ptr.vmem [resolvable:$true] %s26
      %29 = dma.hbm_to_vmem [thread:$0]  %s0, 128, %s27, [#allocation3]
    $region5: #{tpu_custom_call.1} parent=1 // pred_fallthru
      _
    // Predicated region
    $region6: #{tpu_custom_call.1} parent=1 // pred_check
      _
    $region7: #{tpu_custom_call.1} parent=1 // pred_check_branch
      %31 = sbr.rel (0) target = $region9
    $region8: #{tpu_custom_call.1} parent=1 // pred_region
      %s33 = ssub.s32 1024, 1024
      %34 = vsyncadd [#allocation6], %s33
      %s35 = sshll.u32 [#allocation5], 4
      %s36 = int_to_ptr.vmem [resolvable:$true] %s35
      %41 = dma.hbm_to_vmem [thread:$0]  %s1, 1024, %s36, [#allocation6], 64, 64, 4
    $region9: #{tpu_custom_call.1} parent=1 // pred_fallthru
      _
    // Predicated region
    $region10: #{tpu_custom_call.1} parent=1 // pred_check
      _
    $region11: #{tpu_custom_call.1} parent=1 // pred_check_branch
      %43 = sbr.rel (0) target = $region13
    $region12: #{tpu_custom_call.1} parent=1 // pred_region
      %s45 = ssub.s32 1024, 1024
      %46 = vsyncadd [#allocation6], %s45
      %s47 = sshll.u32 [#allocation7], 4
      %s48 = int_to_ptr.vmem [resolvable:$true] %s47
      %53 = dma.hbm_to_vmem [thread:$0]  %s2, 1024, %s48, [#allocation6], 64, 64, 4
    $region13: #{tpu_custom_call.1} parent=1 // pred_fallthru
      _
    // Predicated region
    $region14: #{tpu_custom_call.1} parent=1 // pred_check
      _
    $region15: #{tpu_custom_call.1} parent=1 // pred_check_branch
      %55 = sbr.rel (0) target = $region17
    $region16: #{tpu_custom_call.1} parent=1 // pred_region
      %s57 = ssub.s32 1024, 1024
      %58 = vsyncadd [#allocation9], %s57
      %s59 = sshll.u32 [#allocation8], 4
      %s60 = int_to_ptr.vmem [resolvable:$true] %s59
      %65 = dma.hbm_to_vmem [thread:$0]  %s3, 1024, %s60, [#allocation9], 64, 64, 4
    $region17: #{tpu_custom_call.1} parent=1 // pred_fallthru
      _
    // Predicated region
    $region18: #{tpu_custom_call.1} parent=1 // pred_check
      _
    $region19: #{tpu_custom_call.1} parent=1 // pred_check_branch
      %67 = sbr.rel (0) target = $region21
    $region20: #{tpu_custom_call.1} parent=1 // pred_region
      %s69 = ssub.s32 1024, 1024
      %70 = vsyncadd [#allocation9], %s69
      %s71 = sshll.u32 [#allocation10], 4
      %s72 = int_to_ptr.vmem [resolvable:$true] %s71
      %77 = dma.hbm_to_vmem [thread:$0]  %s4, 1024, %s72, [#allocation9], 64, 64, 4
    $region21: #{tpu_custom_call.1} parent=1 // pred_fallthru
      _
    // Predicated region
    $region22: #{tpu_custom_call.1} parent=1 // pred_check
      _
    $region23: #{tpu_custom_call.1} parent=1 // pred_check_branch
      %79 = sbr.rel (0) target = $region25
    $region24: #{tpu_custom_call.1} parent=1 // pred_region
      _
    $region25: #{tpu_custom_call.1} parent=1 // pred_fallthru
      _
    // Predicated region
    $region26: #{tpu_custom_call.1} parent=1 // pred_check
      _
    $region27: #{tpu_custom_call.1} parent=1 // pred_check_branch
      %81 = sbr.rel (0) target = $region29
    $region28: #{tpu_custom_call.1} parent=1 // pred_region
      _
    $region29: #{tpu_custom_call.1} parent=1 // pred_fallthru
      _
    // Predicated region
    $region30: #{tpu_custom_call.1} parent=1 // pred_check
      _
    $region31: #{tpu_custom_call.1} parent=1 // pred_check_branch
      %83 = sbr.rel (0) target = $region33
    $region32: #{tpu_custom_call.1} parent=1 // pred_region
      %84 = dma.done [#allocation3], 128
    $region33: #{tpu_custom_call.1} parent=1 // pred_fallthru
      _
    // Predicated region
    $region34: #{tpu_custom_call.1} parent=1 // pred_check
      _
    $region35: #{tpu_custom_call.1} parent=1 // pred_check_branch
      %86 = sbr.rel (0) target = $region37
    $region36: #{tpu_custom_call.1} parent=1 // pred_region
      %87 = dma.done [#allocation6], 1024
    $region37: #{tpu_custom_call.1} parent=1 // pred_fallthru
      _
    // Predicated region
    $region38: #{tpu_custom_call.1} parent=1 // pred_check
      _
    $region39: #{tpu_custom_call.1} parent=1 // pred_check_branch
      %89 = sbr.rel (0) target = $region41
    $region40: #{tpu_custom_call.1} parent=1 // pred_region
      %90 = dma.done [#allocation6], 1024
    $region41: #{tpu_custom_call.1} parent=1 // pred_fallthru
      _
    // Predicated region
    $region42: #{tpu_custom_call.1} parent=1 // pred_check
      _
    $region43: #{tpu_custom_call.1} parent=1 // pred_check_branch
      %92 = sbr.rel (0) target = $region45
    $region44: #{tpu_custom_call.1} parent=1 // pred_region
      %93 = dma.done [#allocation9], 1024
    $region45: #{tpu_custom_call.1} parent=1 // pred_fallthru
      _
    // Predicated region
    $region46: #{tpu_custom_call.1} parent=1 // pred_check
      _
    $region47: #{tpu_custom_call.1} parent=1 // pred_check_branch
      %95 = sbr.rel (0) target = $region49
    $region48: #{tpu_custom_call.1} parent=1 // pred_region
      %96 = dma.done [#allocation9], 1024
    $region49: #{tpu_custom_call.1} parent=1 // pred_fallthru
      _
    %v98 = vld [vmem:[#allocation2] sm:$0xff]
    %v99 = vpack.c.bf16 %v98, %v98
    %v100 = vld [vmem:[#allocation5] sm:$0xf]
    %v101 = vld [vmem:[#allocation5 + $0x4] sm:$0xf]
    %v102 = vld [vmem:[#allocation5 + $0x8] sm:$0xf]
    %v103 = vld [vmem:[#allocation5 + $0xc] sm:$0xf]
    %v104 = vld [vmem:[#allocation5 + $0x10] sm:$0xf]
    %v105 = vld [vmem:[#allocation5 + $0x14] sm:$0xf]
    %v106 = vld [vmem:[#allocation5 + $0x18] sm:$0xf]
    %v107 = vld [vmem:[#allocation5 + $0x1c] sm:$0xf]
    %v108 = vld [vmem:[#allocation5 + $0x20] sm:$0xf]
    %v109 = vld [vmem:[#allocation5 + $0x24] sm:$0xf]
    %v110 = vld [vmem:[#allocation5 + $0x28] sm:$0xf]
    %v111 = vld [vmem:[#allocation5 + $0x2c] sm:$0xf]
    %v112 = vld [vmem:[#allocation5 + $0x30] sm:$0xf]
    %v113 = vld [vmem:[#allocation5 + $0x34] sm:$0xf]
    %v114 = vld [vmem:[#allocation5 + $0x38] sm:$0xf]
    %v115 = vld [vmem:[#allocation5 + $0x3c] sm:$0xf]
    %v132 = vunpack.c.l.b16 %v100
    %v133 = vunpack.c.l.b16 %v101
    %v134 = vunpack.c.l.b16 %v102
    %v135 = vunpack.c.l.b16 %v103
    %v136 = vunpack.c.l.b16 %v104
    %v137 = vunpack.c.l.b16 %v105
    %v138 = vunpack.c.l.b16 %v106
    %v139 = vunpack.c.l.b16 %v107
    %v140 = vunpack.c.l.b16 %v108
    %v141 = vunpack.c.l.b16 %v109
    %v142 = vunpack.c.l.b16 %v110
    %v143 = vunpack.c.l.b16 %v111
    %v144 = vunpack.c.l.b16 %v112
    %v145 = vunpack.c.l.b16 %v113
    %v146 = vunpack.c.l.b16 %v114
    %v147 = vunpack.c.l.b16 %v115
    %v148 = vpack.c.b16 %v133, %v132
    %v149 = vpack.c.b16 %v135, %v134
    %v150 = vpack.c.b16 %v137, %v136
    %v151 = vpack.c.b16 %v139, %v138
    %v152 = vpack.c.b16 %v141, %v140
    %v153 = vpack.c.b16 %v143, %v142
    %v154 = vpack.c.b16 %v145, %v144
    %v155 = vpack.c.b16 %v147, %v146
    %164 = vmatprep.subr.bf16.mxu0 0
    %165 = vmatpush1.bf16.msra.mxu0 %v148
    %166 = vmatprep.subr.bf16.mxu0 0
    %167 = vmatpush1.bf16.msra.mxu0 %v149
    %168 = vmatprep.subr.bf16.mxu0 0
    %169 = vmatpush1.bf16.msra.mxu0 %v150
    %170 = vmatprep.subr.bf16.mxu0 0
    %171 = vmatpush1.bf16.msra.mxu0 %v151
    %172 = vmatprep.subr.bf16.mxu0 0
    %173 = vmatpush1.bf16.msra.mxu0 %v152
    %174 = vmatprep.subr.bf16.mxu0 0
    %175 = vmatpush1.bf16.msra.mxu0 %v153
    %176 = vmatprep.subr.bf16.mxu0 0
    %177 = vmatpush1.bf16.msra.mxu0 %v154
    %178 = vmatprep.subr.bf16.mxu0 0
    %179 = vmatpush1.bf16.msra.mxu0 %v155
    %180 = vmatprep.subr.bf16.mxu0 0
    %181 = vmatpush1.bf16.msra.mxu0 0
    %182 = vmatprep.subr.bf16.mxu0 0
    %183 = vmatpush1.bf16.msra.mxu0 0
    %184 = vmatprep.subr.bf16.mxu0 0
    %185 = vmatpush1.bf16.msra.mxu0 0
    %186 = vmatprep.subr.bf16.mxu0 0
    %187 = vmatpush1.bf16.msra.mxu0 0
    %188 = vmatprep.subr.bf16.mxu0 0
    %189 = vmatpush1.bf16.msra.mxu0 0
    %190 = vmatprep.subr.bf16.mxu0 0
    %191 = vmatpush1.bf16.msra.mxu0 0
    %192 = vmatprep.subr.bf16.mxu0 0
    %193 = vmatpush1.bf16.msra.mxu0 0
    %194 = vmatprep.subr.bf16.mxu0 0
    %195 = vmatpush1.bf16.msra.mxu0 0
    %196 = vmatprep.mubr.bf16.mxu0 0
    %197 = vmatmul.mubr.bf16.gmra.mrb[0].mxu0 %v99
    %v198 = vpop.f32.mrb[0].mxu0
    %v199 = vadd.f32 0.0, %v198
    %v200 = vpop.f32.mrb[0].mxu0
    %v201 = vpop.f32.mrb[0].mxu0
    %v202 = vpop.f32.mrb[0].mxu0
    %203 = vdwg.mxu0
    %204 = vst [vmem:[#allocation14] sm:$0xff] %v199
    %v205 = vpack.c.bf16 %v199, %v199
    %v206 = vld [vmem:[#allocation7] sm:$0xf]
    %v207 = vld [vmem:[#allocation7 + $0x4] sm:$0xf]
    %v208 = vld [vmem:[#allocation7 + $0x8] sm:$0xf]
    %v209 = vld [vmem:[#allocation7 + $0xc] sm:$0xf]
    %v210 = vld [vmem:[#allocation7 + $0x10] sm:$0xf]
    %v211 = vld [vmem:[#allocation7 + $0x14] sm:$0xf]
    %v212 = vld [vmem:[#allocation7 + $0x18] sm:$0xf]
    %v213 = vld [vmem:[#allocation7 + $0x1c] sm:$0xf]
    %v214 = vld [vmem:[#allocation7 + $0x20] sm:$0xf]
    %v215 = vld [vmem:[#allocation7 + $0x24] sm:$0xf]
    %v216 = vld [vmem:[#allocation7 + $0x28] sm:$0xf]
    %v217 = vld [vmem:[#allocation7 + $0x2c] sm:$0xf]
    %v218 = vld [vmem:[#allocation7 + $0x30] sm:$0xf]
    %v219 = vld [vmem:[#allocation7 + $0x34] sm:$0xf]
    %v220 = vld [vmem:[#allocation7 + $0x38] sm:$0xf]
    %v221 = vld [vmem:[#allocation7 + $0x3c] sm:$0xf]
    %v238 = vunpack.c.l.b16 %v206
    %v239 = vunpack.c.l.b16 %v207
    %v240 = vunpack.c.l.b16 %v208
    %v241 = vunpack.c.l.b16 %v209
    %v242 = vunpack.c.l.b16 %v210
    %v243 = vunpack.c.l.b16 %v211
    %v244 = vunpack.c.l.b16 %v212
    %v245 = vunpack.c.l.b16 %v213
    %v246 = vunpack.c.l.b16 %v214
    %v247 = vunpack.c.l.b16 %v215
    %v248 = vunpack.c.l.b16 %v216
    %v249 = vunpack.c.l.b16 %v217
    %v250 = vunpack.c.l.b16 %v218
    %v251 = vunpack.c.l.b16 %v219
    %v252 = vunpack.c.l.b16 %v220
    %v253 = vunpack.c.l.b16 %v221
    %v254 = vpack.c.b16 %v239, %v238
    %v255 = vpack.c.b16 %v241, %v240
    %v256 = vpack.c.b16 %v243, %v242
    %v257 = vpack.c.b16 %v245, %v244
    %v258 = vpack.c.b16 %v247, %v246
    %v259 = vpack.c.b16 %v249, %v248
    %v260 = vpack.c.b16 %v251, %v250
    %v261 = vpack.c.b16 %v253, %v252
    %270 = vmatprep.subr.bf16.mxu0 0
    %271 = vmatpush1.bf16.msra.mxu0 %v254
    %272 = vmatprep.subr.bf16.mxu0 0
    %273 = vmatpush1.bf16.msra.mxu0 %v255
    %274 = vmatprep.subr.bf16.mxu0 0
    %275 = vmatpush1.bf16.msra.mxu0 %v256
    %276 = vmatprep.subr.bf16.mxu0 0
    %277 = vmatpush1.bf16.msra.mxu0 %v257
    %278 = vmatprep.subr.bf16.mxu0 0
    %279 = vmatpush1.bf16.msra.mxu0 %v258
    %280 = vmatprep.subr.bf16.mxu0 0
    %281 = vmatpush1.bf16.msra.mxu0 %v259
    %282 = vmatprep.subr.bf16.mxu0 0
    %283 = vmatpush1.bf16.msra.mxu0 %v260
    %284 = vmatprep.subr.bf16.mxu0 0
    %285 = vmatpush1.bf16.msra.mxu0 %v261
    %286 = vmatprep.subr.bf16.mxu0 0
    %287 = vmatpush1.bf16.msra.mxu0 0
    %288 = vmatprep.subr.bf16.mxu0 0
    %289 = vmatpush1.bf16.msra.mxu0 0
    %290 = vmatprep.subr.bf16.mxu0 0
    %291 = vmatpush1.bf16.msra.mxu0 0
    %292 = vmatprep.subr.bf16.mxu0 0
    %293 = vmatpush1.bf16.msra.mxu0 0
    %294 = vmatprep.subr.bf16.mxu0 0
    %295 = vmatpush1.bf16.msra.mxu0 0
    %296 = vmatprep.subr.bf16.mxu0 0
    %297 = vmatpush1.bf16.msra.mxu0 0
    %298 = vmatprep.subr.bf16.mxu0 0
    %299 = vmatpush1.bf16.msra.mxu0 0
    %300 = vmatprep.subr.bf16.mxu0 0
    %301 = vmatpush1.bf16.msra.mxu0 0
    %302 = vmatprep.mubr.bf16.mxu0 0
    %303 = vmatmul.mubr.bf16.gmra.mrb[0].mxu0 %v205
    %v304 = vpop.f32.mrb[0].mxu0
    %v305 = vadd.f32 0.0, %v304
    %v306 = vpop.f32.mrb[0].mxu0
    %v307 = vpop.f32.mrb[0].mxu0
    %v308 = vpop.f32.mrb[0].mxu0
    %309 = vdwg.mxu0
    %v310 = vxor.u32 %v305, 2147483648
    %v311 = vmul.f32 %v310, 1.442695
    %v312 = vpow.pop %v311
    %v313 = vadd.f32 %v312, 1.0
    %v314 = vrcp.pop %v313
    %v315 = vmul.f32 1.0, %v314
    %316 = vst [vmem:[#allocation12] sm:$0xff] %v315
    %v317 = vld [vmem:[#allocation8] sm:$0xf]
    %v318 = vld [vmem:[#allocation8 + $0x4] sm:$0xf]
    %v319 = vld [vmem:[#allocation8 + $0x8] sm:$0xf]
    %v320 = vld [vmem:[#allocation8 + $0xc] sm:$0xf]
    %v321 = vld [vmem:[#allocation8 + $0x10] sm:$0xf]
    %v322 = vld [vmem:[#allocation8 + $0x14] sm:$0xf]
    %v323 = vld [vmem:[#allocation8 + $0x18] sm:$0xf]
    %v324 = vld [vmem:[#allocation8 + $0x1c] sm:$0xf]
    %v325 = vld [vmem:[#allocation8 + $0x20] sm:$0xf]
    %v326 = vld [vmem:[#allocation8 + $0x24] sm:$0xf]
    %v327 = vld [vmem:[#allocation8 + $0x28] sm:$0xf]
    %v328 = vld [vmem:[#allocation8 + $0x2c] sm:$0xf]
    %v329 = vld [vmem:[#allocation8 + $0x30] sm:$0xf]
    %v330 = vld [vmem:[#allocation8 + $0x34] sm:$0xf]
    %v331 = vld [vmem:[#allocation8 + $0x38] sm:$0xf]
    %v332 = vld [vmem:[#allocation8 + $0x3c] sm:$0xf]
    %v349 = vunpack.c.l.b16 %v317
    %v350 = vunpack.c.l.b16 %v318
    %v351 = vunpack.c.l.b16 %v319
    %v352 = vunpack.c.l.b16 %v320
    %v353 = vunpack.c.l.b16 %v321
    %v354 = vunpack.c.l.b16 %v322
    %v355 = vunpack.c.l.b16 %v323
    %v356 = vunpack.c.l.b16 %v324
    %v357 = vunpack.c.l.b16 %v325
    %v358 = vunpack.c.l.b16 %v326
    %v359 = vunpack.c.l.b16 %v327
    %v360 = vunpack.c.l.b16 %v328
    %v361 = vunpack.c.l.b16 %v329
    %v362 = vunpack.c.l.b16 %v330
    %v363 = vunpack.c.l.b16 %v331
    %v364 = vunpack.c.l.b16 %v332
    %v365 = vpack.c.b16 %v350, %v349
    %v366 = vpack.c.b16 %v352, %v351
    %v367 = vpack.c.b16 %v354, %v353
    %v368 = vpack.c.b16 %v356, %v355
    %v369 = vpack.c.b16 %v358, %v357
    %v370 = vpack.c.b16 %v360, %v359
    %v371 = vpack.c.b16 %v362, %v361
    %v372 = vpack.c.b16 %v364, %v363
    %381 = vmatprep.subr.bf16.mxu0 0
    %382 = vmatpush1.bf16.msra.mxu0 %v365
    %383 = vmatprep.subr.bf16.mxu0 0
    %384 = vmatpush1.bf16.msra.mxu0 %v366
    %385 = vmatprep.subr.bf16.mxu0 0
    %386 = vmatpush1.bf16.msra.mxu0 %v367
    %387 = vmatprep.subr.bf16.mxu0 0
    %388 = vmatpush1.bf16.msra.mxu0 %v368
    %389 = vmatprep.subr.bf16.mxu0 0
    %390 = vmatpush1.bf16.msra.mxu0 %v369
    %391 = vmatprep.subr.bf16.mxu0 0
    %392 = vmatpush1.bf16.msra.mxu0 %v370
    %393 = vmatprep.subr.bf16.mxu0 0
    %394 = vmatpush1.bf16.msra.mxu0 %v371
    %395 = vmatprep.subr.bf16.mxu0 0
    %396 = vmatpush1.bf16.msra.mxu0 %v372
    %397 = vmatprep.subr.bf16.mxu0 0
    %398 = vmatpush1.bf16.msra.mxu0 0
    %399 = vmatprep.subr.bf16.mxu0 0
    %400 = vmatpush1.bf16.msra.mxu0 0
    %401 = vmatprep.subr.bf16.mxu0 0
    %402 = vmatpush1.bf16.msra.mxu0 0
    %403 = vmatprep.subr.bf16.mxu0 0
    %404 = vmatpush1.bf16.msra.mxu0 0
    %405 = vmatprep.subr.bf16.mxu0 0
    %406 = vmatpush1.bf16.msra.mxu0 0
    %407 = vmatprep.subr.bf16.mxu0 0
    %408 = vmatpush1.bf16.msra.mxu0 0
    %409 = vmatprep.subr.bf16.mxu0 0
    %410 = vmatpush1.bf16.msra.mxu0 0
    %411 = vmatprep.subr.bf16.mxu0 0
    %412 = vmatpush1.bf16.msra.mxu0 0
    %413 = vmatprep.mubr.bf16.mxu0 0
    %414 = vmatmul.mubr.bf16.gmra.mrb[0].mxu0 %v205
    %v415 = vpop.f32.mrb[0].mxu0
    %v416 = vadd.f32 0.0, %v415
    %v417 = vpop.f32.mrb[0].mxu0
    %v418 = vpop.f32.mrb[0].mxu0
    %v419 = vpop.f32.mrb[0].mxu0
    %420 = vdwg.mxu0
    %v421 = vmul.f32 %v416, 0.5
    %v422 = vmul.f32 %v416, 0.70710677
    %v423 = verf.f32.pop %v422
    %v424 = vadd.f32 %v423, 1.0
    %v425 = vmul.f32 %v421, %v424
    %v426 = vpack.c.bf16 %v425, %v425
    %v427 = vld [vmem:[#allocation10] sm:$0xf]
    %v428 = vld [vmem:[#allocation10 + $0x4] sm:$0xf]
    %v429 = vld [vmem:[#allocation10 + $0x8] sm:$0xf]
    %v430 = vld [vmem:[#allocation10 + $0xc] sm:$0xf]
    %v431 = vld [vmem:[#allocation10 + $0x10] sm:$0xf]
    %v432 = vld [vmem:[#allocation10 + $0x14] sm:$0xf]
    %v433 = vld [vmem:[#allocation10 + $0x18] sm:$0xf]
    %v434 = vld [vmem:[#allocation10 + $0x1c] sm:$0xf]
    %v435 = vld [vmem:[#allocation10 + $0x20] sm:$0xf]
    %v436 = vld [vmem:[#allocation10 + $0x24] sm:$0xf]
    %v437 = vld [vmem:[#allocation10 + $0x28] sm:$0xf]
    %v438 = vld [vmem:[#allocation10 + $0x2c] sm:$0xf]
    %v439 = vld [vmem:[#allocation10 + $0x30] sm:$0xf]
    %v440 = vld [vmem:[#allocation10 + $0x34] sm:$0xf]
    %v441 = vld [vmem:[#allocation10 + $0x38] sm:$0xf]
    %v442 = vld [vmem:[#allocation10 + $0x3c] sm:$0xf]
    %v459 = vunpack.c.l.b16 %v427
    %v460 = vunpack.c.l.b16 %v428
    %v461 = vunpack.c.l.b16 %v429
    %v462 = vunpack.c.l.b16 %v430
    %v463 = vunpack.c.l.b16 %v431
    %v464 = vunpack.c.l.b16 %v432
    %v465 = vunpack.c.l.b16 %v433
    %v466 = vunpack.c.l.b16 %v434
    %v467 = vunpack.c.l.b16 %v435
    %v468 = vunpack.c.l.b16 %v436
    %v469 = vunpack.c.l.b16 %v437
    %v470 = vunpack.c.l.b16 %v438
    %v471 = vunpack.c.l.b16 %v439
    %v472 = vunpack.c.l.b16 %v440
    %v473 = vunpack.c.l.b16 %v441
    %v474 = vunpack.c.l.b16 %v442
    %v475 = vpack.c.b16 %v460, %v459
    %v476 = vpack.c.b16 %v462, %v461
    %v477 = vpack.c.b16 %v464, %v463
    %v478 = vpack.c.b16 %v466, %v465
    %v479 = vpack.c.b16 %v468, %v467
    %v480 = vpack.c.b16 %v470, %v469
    %v481 = vpack.c.b16 %v472, %v471
    %v482 = vpack.c.b16 %v474, %v473
    %491 = vmatprep.subr.bf16.mxu0 0
    %492 = vmatpush1.bf16.msra.mxu0 %v475
    %493 = vmatprep.subr.bf16.mxu0 0
    %494 = vmatpush1.bf16.msra.mxu0 %v476
    %495 = vmatprep.subr.bf16.mxu0 0
    %496 = vmatpush1.bf16.msra.mxu0 %v477
    %497 = vmatprep.subr.bf16.mxu0 0
    %498 = vmatpush1.bf16.msra.mxu0 %v478
    %499 = vmatprep.subr.bf16.mxu0 0
    %500 = vmatpush1.bf16.msra.mxu0 %v479
    %501 = vmatprep.subr.bf16.mxu0 0
    %502 = vmatpush1.bf16.msra.mxu0 %v480
    %503 = vmatprep.subr.bf16.mxu0 0
    %504 = vmatpush1.bf16.msra.mxu0 %v481
    %505 = vmatprep.subr.bf16.mxu0 0
    %506 = vmatpush1.bf16.msra.mxu0 %v482
    %507 = vmatprep.subr.bf16.mxu0 0
    %508 = vmatpush1.bf16.msra.mxu0 0
    %509 = vmatprep.subr.bf16.mxu0 0
    %510 = vmatpush1.bf16.msra.mxu0 0
    %511 = vmatprep.subr.bf16.mxu0 0
    %512 = vmatpush1.bf16.msra.mxu0 0
    %513 = vmatprep.subr.bf16.mxu0 0
    %514 = vmatpush1.bf16.msra.mxu0 0
    %515 = vmatprep.subr.bf16.mxu0 0
    %516 = vmatpush1.bf16.msra.mxu0 0
    %517 = vmatprep.subr.bf16.mxu0 0
    %518 = vmatpush1.bf16.msra.mxu0 0
    %519 = vmatprep.subr.bf16.mxu0 0
    %520 = vmatpush1.bf16.msra.mxu0 0
    %521 = vmatprep.subr.bf16.mxu0 0
    %522 = vmatpush1.bf16.msra.mxu0 0
    %523 = vmatprep.mubr.bf16.mxu0 0
    %524 = vmatmul.mubr.bf16.gmra.mrb[0].mxu0 %v426
    %v525 = vpop.f32.mrb[0].mxu0
    %v526 = vadd.f32 0.0, %v525
    %v527 = vpop.f32.mrb[0].mxu0
    %v528 = vpop.f32.mrb[0].mxu0
    %v529 = vpop.f32.mrb[0].mxu0
    %530 = vdwg.mxu0
    %v531 = vadd.f32 %v416, %v526
    %532 = vadd.xlane.f32.xlu0 %v531
    %v533 = vpop.xlane.xlu0 %532
    %v534 = vmul.f32 %v533, 0.03125
    %v535 = vmul.f32 %v531, %v531
    %536 = vadd.xlane.f32.xlu0 %v535
    %v537 = vpop.xlane.xlu0 %536
    %v538 = vmul.f32 %v537, 0.03125
    %v539 = vmul.f32 %v534, %v534
    %v540 = vsub.f32 %v538, %v539
    %v541 = vmax.f32 %v540, 0.0
    %v542 = vsub.f32 %v531, %v534
    %v543 = vadd.f32 %v541, 1e-05
    %v544 = vrsqrt.pop %v543
    %v545 = vmul.f32 %v542, %v544
    %v546 = vld [vmem:[%s5] sm:$0x1]
    %v548 = vlaneseq
    %v549 = vshrl.u32 %v548, 7
    %v550 = vsub.s32 0, %v549
    %v551 = vrot.slane %v546, %v550
    %v553 = vmul.f32 %v545, %v551
    %v554 = vld [vmem:[%s6] sm:$0x1]
    %v556 = vlaneseq
    %v557 = vshrl.u32 %v556, 7
    %v558 = vsub.s32 0, %v557
    %v559 = vrot.slane %v554, %v558
    %v561 = vadd.f32 %v553, %v559
    %562 = vst [vmem:[#allocation11] sm:$0xff] %v561
    // Predicated region
    $region50: #{tpu_custom_call.1} parent=1 // pred_check
      _
    $region51: #{tpu_custom_call.1} parent=1 // pred_check_branch
      %564 = sbr.rel (0) target = $region53
    $region52: #{tpu_custom_call.1} parent=1 // pred_region
      %s566 = ssub.s32 128, 128
      %567 = vsyncadd [#allocation4], %s566
      %s569 = sshll.u32 [#allocation11], 4
      %s570 = int_to_ptr.vmem [resolvable:$true] %s569
      %572 = dma.vmem_to_hbm [thread:$0]  %s570, 128, %s7, [#allocation4]
    $region53: #{tpu_custom_call.1} parent=1 // pred_fallthru
      _
    // Predicated region
    $region54: #{tpu_custom_call.1} parent=1 // pred_check
      _
    $region55: #{tpu_custom_call.1} parent=1 // pred_check_branch
      %574 = sbr.rel (0) target = $region57
    $region56: #{tpu_custom_call.1} parent=1 // pred_region
      %s576 = ssub.s32 128, 128
      %577 = vsyncadd [#allocation13], %s576
      %s579 = sshll.u32 [#allocation12], 4
      %s580 = int_to_ptr.vmem [resolvable:$true] %s579
      %582 = dma.vmem_to_hbm [thread:$0]  %s580, 128, %s8, [#allocation13]
    $region57: #{tpu_custom_call.1} parent=1 // pred_fallthru
      _
    // Predicated region
    $region58: #{tpu_custom_call.1} parent=1 // pred_check
      _
    $region59: #{tpu_custom_call.1} parent=1 // pred_check_branch
      %584 = sbr.rel (0) target = $region61
    $region60: #{tpu_custom_call.1} parent=1 // pred_region
      %s586 = ssub.s32 128, 128
      %587 = vsyncadd [#allocation13], %s586
      %s589 = sshll.u32 [#allocation14], 4
      %s590 = int_to_ptr.vmem [resolvable:$true] %s589
      %592 = dma.vmem_to_hbm [thread:$0]  %s590, 128, %s9, [#allocation13]
    $region61: #{tpu_custom_call.1} parent=1 // pred_fallthru
      _
    // Predicated region
    $region62: #{tpu_custom_call.1} parent=1 // pred_check
      _
    $region63: #{tpu_custom_call.1} parent=1 // pred_check_branch
      %594 = sbr.rel (0) target = $region65
    $region64: #{tpu_custom_call.1} parent=1 // pred_region
      %595 = dma.done [#allocation4], 128
    $region65: #{tpu_custom_call.1} parent=1 // pred_fallthru
      _
    // Predicated region
    $region66: #{tpu_custom_call.1} parent=1 // pred_check
      _
    $region67: #{tpu_custom_call.1} parent=1 // pred_check_branch
      %597 = sbr.rel (0) target = $region69
    $region68: #{tpu_custom_call.1} parent=1 // pred_region
      %598 = dma.done [#allocation13], 128
    $region69: #{tpu_custom_call.1} parent=1 // pred_fallthru
      _
    // Predicated region
    $region70: #{tpu_custom_call.1} parent=1 // pred_check
      _
    $region71: #{tpu_custom_call.1} parent=1 // pred_check_branch
      %600 = sbr.rel (0) target = $region73
    $region72: #{tpu_custom_call.1} parent=1 // pred_region
      %601 = dma.done [#allocation13], 128
    $region73: #{tpu_custom_call.1} parent=1 // pred_fallthru
      _
    %602 = vsyncpa [#allocation3], 1
    %603 = vsyncpa [#allocation6], 1
    %604 = vsyncpa [#allocation9], 1
    %605 = vsyncpa [#allocation4], 1
    %606 = vsyncpa [#allocation13], 1

// kernel: tpu_custom_call.1
$region0: #{tpu_custom_call.1}
  #allocation0 [shape = 'u32[]', space=smem, size = 0x4, offset = 0x4, fixed_abs, tag = 'smem constant byte address 0x4 - core index']
  #allocation1 [shape = 'u32[144,128]{1,0:T(1,128)}', space=vmem, size = 0x12000, scoped, tag = 'internal scratch']
  %s0 = inlined_call_operand.hbm [shape: f32[8,128], index: 0, kind: input, shape index: {}]
  %s1 = inlined_call_operand.hbm [shape: bf16[128,128], index: 1, kind: input, shape index: {}]
  %s2 = inlined_call_operand.hbm [shape: bf16[128,128], index: 2, kind: input, shape index: {}]
  %s3 = inlined_call_operand.hbm [shape: bf16[128,128], index: 3, kind: input, shape index: {}]
  %s4 = inlined_call_operand.hbm [shape: bf16[128,128], index: 4, kind: input, shape index: {}]
  %s5 = inlined_call_operand.vmem [shape: f32[1,128], index: 5, kind: input, shape index: {}]
  %s6 = inlined_call_operand.vmem [shape: f32[1,128], index: 6, kind: input, shape index: {}]
  %s7 = inlined_call_operand.hbm [shape: f32[8,128], index: 7, kind: output, shape index: {0}]
  %s8 = inlined_call_operand.hbm [shape: f32[8,128], index: 8, kind: output, shape index: {1}]
  %s9 = inlined_call_operand.hbm [shape: f32[8,128], index: 9, kind: output, shape index: {2}]
  %10 = xla_tuple %s7, %s8, %s9
  %s11 = sld [smem:[#allocation0]]
  $region74: #{tpu_custom_call.1} parent=0
    _
  %s13 = ssub.s32 1, %s11
  %s14 = scalar_select 0, %s13, %s11
  $region1: #{tpu_custom_call.1} parent=0
    #allocation2 [shape = 'u8[4096]{0}', space=vmem, size = 0x1000, scoped, tag = 'input window, operand 0, single buffered']
    #allocation3 [shape = 's32[1]{0}', space=sflag, size = 0x4, scoped, tag = 'scoped memory for tpu_custom_call.1']
    #allocation4 [shape = 's32[1]{0}', space=sflag, size = 0x4, scoped, tag = 'scoped memory for tpu_custom_call.1']
    #allocation5 [shape = 'u8[32768]{0}', space=vmem, size = 0x8000, scoped, tag = 'input window, operand 1, single buffered']
    #allocation6 [shape = 's32[1]{0}', space=sflag, size = 0x4, scoped, tag = 'scoped memory for tpu_custom_call.1']
    #allocation7 [shape = 'u8[32768]{0}', space=vmem, size = 0x8000, scoped, tag = 'input window, operand 2, single buffered']
    #allocation8 [shape = 'u8[32768]{0}', space=vmem, size = 0x8000, scoped, tag = 'input window, operand 3, single buffered']
    #allocation9 [shape = 's32[1]{0}', space=sflag, size = 0x4, scoped, tag = 'scoped memory for tpu_custom_call.1']
    #allocation10 [shape = 'u8[32768]{0}', space=vmem, size = 0x8000, scoped, tag = 'input window, operand 4, single buffered']
    #allocation11 [shape = 'u8[4096]{0}', space=vmem, size = 0x1000, scoped, tag = 'output window, operand 0, single buffered']
    #allocation12 [shape = 'u8[4096]{0}', space=vmem, size = 0x1000, scoped, tag = 'output window, operand 1, single buffered']
    #allocation13 [shape = 's32[1]{0}', space=sflag, size = 0x4, scoped, tag = 'scoped memory for tpu_custom_call.1']
    #allocation14 [shape = 'u8[4096]{0}', space=vmem, size = 0x1000, scoped, tag = 'output window, operand 2, single buffered']
    %15 = vsyncpa [#allocation3], 0
    %16 = vsyncpa [#allocation6], 0
    %17 = vsyncpa [#allocation9], 0
    %18 = vsyncpa [#allocation4], 0
    %19 = vsyncpa [#allocation13], 0
    // Predicated region
    $region2: #{tpu_custom_call.1} parent=1 // pred_check
      _
    $region3: #{tpu_custom_call.1} parent=1 // pred_check_branch
      %21 = sbr.rel (0) target = $region5
    $region4: #{tpu_custom_call.1} parent=1 // pred_region
      %s23 = ssub.s32 128, 128
      %24 = vsyncadd [#allocation3], %s23
      %s26 = sshll.u32 [#allocation2], 4
      %s27 = int_to_ptr.vmem [resolvable:$true] %s26
      %29 = dma.hbm_to_vmem [thread:$0]  %s0, 128, %s27, [#allocation3]
    $region5: #{tpu_custom_call.1} parent=1 // pred_fallthru
      _
    // Predicated region
    $region6: #{tpu_custom_call.1} parent=1 // pred_check
      _
    $region7: #{tpu_custom_call.1} parent=1 // pred_check_branch
      %31 = sbr.rel (0) target = $region9
    $region8: #{tpu_custom_call.1} parent=1 // pred_region
      %s33 = ssub.s32 1024, 1024
      %34 = vsyncadd [#allocation6], %s33
      %s35 = sshll.u32 [#allocation5], 4
      %s36 = int_to_ptr.vmem [resolvable:$true] %s35
      %41 = dma.hbm_to_vmem [thread:$0]  %s1, 1024, %s36, [#allocation6], 64, 64, 4
    $region9: #{tpu_custom_call.1} parent=1 // pred_fallthru
      _
    // Predicated region
    $region10: #{tpu_custom_call.1} parent=1 // pred_check
      _
    $region11: #{tpu_custom_call.1} parent=1 // pred_check_branch
      %43 = sbr.rel (0) target = $region13
    $region12: #{tpu_custom_call.1} parent=1 // pred_region
      %s45 = ssub.s32 1024, 1024
      %46 = vsyncadd [#allocation6], %s45
      %s47 = sshll.u32 [#allocation7], 4
      %s48 = int_to_ptr.vmem [resolvable:$true] %s47
      %53 = dma.hbm_to_vmem [thread:$0]  %s2, 1024, %s48, [#allocation6], 64, 64, 4
    $region13: #{tpu_custom_call.1} parent=1 // pred_fallthru
      _
    // Predicated region
    $region14: #{tpu_custom_call.1} parent=1 // pred_check
      _
    $region15: #{tpu_custom_call.1} parent=1 // pred_check_branch
      %55 = sbr.rel (0) target = $region17
    $region16: #{tpu_custom_call.1} parent=1 // pred_region
      %s57 = ssub.s32 1024, 1024
      %58 = vsyncadd [#allocation9], %s57
      %s59 = sshll.u32 [#allocation8], 4
      %s60 = int_to_ptr.vmem [resolvable:$true] %s59
      %65 = dma.hbm_to_vmem [thread:$0]  %s3, 1024, %s60, [#allocation9], 64, 64, 4
    $region17: #{tpu_custom_call.1} parent=1 // pred_fallthru
      _
    // Predicated region
    $region18: #{tpu_custom_call.1} parent=1 // pred_check
      _
    $region19: #{tpu_custom_call.1} parent=1 // pred_check_branch
      %67 = sbr.rel (0) target = $region21
    $region20: #{tpu_custom_call.1} parent=1 // pred_region
      %s69 = ssub.s32 1024, 1024
      %70 = vsyncadd [#allocation9], %s69
      %s71 = sshll.u32 [#allocation10], 4
      %s72 = int_to_ptr.vmem [resolvable:$true] %s71
      %77 = dma.hbm_to_vmem [thread:$0]  %s4, 1024, %s72, [#allocation9], 64, 64, 4
    $region21: #{tpu_custom_call.1} parent=1 // pred_fallthru
      _
    // Predicated region
    $region22: #{tpu_custom_call.1} parent=1 // pred_check
      _
    $region23: #{tpu_custom_call.1} parent=1 // pred_check_branch
      %79 = sbr.rel (0) target = $region25
    $region24: #{tpu_custom_call.1} parent=1 // pred_region
      _
    $region25: #{tpu_custom_call.1} parent=1 // pred_fallthru
      _
    // Predicated region
    $region26: #{tpu_custom_call.1} parent=1 // pred_check
      _
    $region27: #{tpu_custom_call.1} parent=1 // pred_check_branch
      %81 = sbr.rel (0) target = $region29
    $region28: #{tpu_custom_call.1} parent=1 // pred_region
      _
    $region29: #{tpu_custom_call.1} parent=1 // pred_fallthru
      _
    // Predicated region
    $region30: #{tpu_custom_call.1} parent=1 // pred_check
      _
    $region31: #{tpu_custom_call.1} parent=1 // pred_check_branch
      %83 = sbr.rel (0) target = $region33
    $region32: #{tpu_custom_call.1} parent=1 // pred_region
      %84 = dma.done [#allocation3], 128
    $region33: #{tpu_custom_call.1} parent=1 // pred_fallthru
      _
    // Predicated region
    $region34: #{tpu_custom_call.1} parent=1 // pred_check
      _
    $region35: #{tpu_custom_call.1} parent=1 // pred_check_branch
      %86 = sbr.rel (0) target = $region37
    $region36: #{tpu_custom_call.1} parent=1 // pred_region
      %87 = dma.done [#allocation6], 1024
    $region37: #{tpu_custom_call.1} parent=1 // pred_fallthru
      _
    // Predicated region
    $region38: #{tpu_custom_call.1} parent=1 // pred_check
      _
    $region39: #{tpu_custom_call.1} parent=1 // pred_check_branch
      %89 = sbr.rel (0) target = $region41
    $region40: #{tpu_custom_call.1} parent=1 // pred_region
      %90 = dma.done [#allocation6], 1024
    $region41: #{tpu_custom_call.1} parent=1 // pred_fallthru
      _
    // Predicated region
    $region42: #{tpu_custom_call.1} parent=1 // pred_check
      _
    $region43: #{tpu_custom_call.1} parent=1 // pred_check_branch
      %92 = sbr.rel (0) target = $region45
    $region44: #{tpu_custom_call.1} parent=1 // pred_region
      %93 = dma.done [#allocation9], 1024
    $region45: #{tpu_custom_call.1} parent=1 // pred_fallthru
      _
    // Predicated region
    $region46: #{tpu_custom_call.1} parent=1 // pred_check
      _
    $region47: #{tpu_custom_call.1} parent=1 // pred_check_branch
      %95 = sbr.rel (0) target = $region49
    $region48: #{tpu_custom_call.1} parent=1 // pred_region
      %96 = dma.done [#allocation9], 1024
    $region49: #{tpu_custom_call.1} parent=1 // pred_fallthru
      _
    %v98 = vld [vmem:[#allocation2] sm:$0xff]
    %v99 = vpack.c.bf16 %v98, %v98
    %v100 = vld [vmem:[#allocation5] sm:$0xf]
    %v101 = vld [vmem:[#allocation5 + $0x4] sm:$0xf]
    %v102 = vld [vmem:[#allocation5 + $0x8] sm:$0xf]
    %v103 = vld [vmem:[#allocation5 + $0xc] sm:$0xf]
    %v104 = vld [vmem:[#allocation5 + $0x10] sm:$0xf]
    %v105 = vld [vmem:[#allocation5 + $0x14] sm:$0xf]
    %v106 = vld [vmem:[#allocation5 + $0x18] sm:$0xf]
    %v107 = vld [vmem:[#allocation5 + $0x1c] sm:$0xf]
    %v108 = vld [vmem:[#allocation5 + $0x20] sm:$0xf]
    %v109 = vld [vmem:[#allocation5 + $0x24] sm:$0xf]
    %v110 = vld [vmem:[#allocation5 + $0x28] sm:$0xf]
    %v111 = vld [vmem:[#allocation5 + $0x2c] sm:$0xf]
    %v112 = vld [vmem:[#allocation5 + $0x30] sm:$0xf]
    %v113 = vld [vmem:[#allocation5 + $0x34] sm:$0xf]
    %v114 = vld [vmem:[#allocation5 + $0x38] sm:$0xf]
    %v115 = vld [vmem:[#allocation5 + $0x3c] sm:$0xf]
    %v132 = vunpack.c.l.b16 %v100
    %v133 = vunpack.c.l.b16 %v101
    %v134 = vunpack.c.l.b16 %v102
    %v135 = vunpack.c.l.b16 %v103
    %v136 = vunpack.c.l.b16 %v104
    %v137 = vunpack.c.l.b16 %v105
    %v138 = vunpack.c.l.b16 %v106
    %v139 = vunpack.c.l.b16 %v107
    %v140 = vunpack.c.l.b16 %v108
    %v141 = vunpack.c.l.b16 %v109
    %v142 = vunpack.c.l.b16 %v110
    %v143 = vunpack.c.l.b16 %v111
    %v144 = vunpack.c.l.b16 %v112
    %v145 = vunpack.c.l.b16 %v113
    %v146 = vunpack.c.l.b16 %v114
    %v147 = vunpack.c.l.b16 %v115
    %v148 = vpack.c.b16 %v133, %v132
    %v149 = vpack.c.b16 %v135, %v134
    %v150 = vpack.c.b16 %v137, %v136
    %v151 = vpack.c.b16 %v139, %v138
    %v152 = vpack.c.b16 %v141, %v140
    %v153 = vpack.c.b16 %v143, %v142
    %v154 = vpack.c.b16 %v145, %v144
    %v155 = vpack.c.b16 %v147, %v146
    %164 = vmatprep.subr.bf16.mxu0 0
    %165 = vmatpush1.bf16.msra.mxu0 %v148
    %166 = vmatprep.subr.bf16.mxu0 0
    %167 = vmatpush1.bf16.msra.mxu0 %v149
    %168 = vmatprep.subr.bf16.mxu0 0
    %169 = vmatpush1.bf16.msra.mxu0 %v150
    %170 = vmatprep.subr.bf16.mxu0 0
    %171 = vmatpush1.bf16.msra.mxu0 %v151
    %172 = vmatprep.subr.bf16.mxu0 0
    %173 = vmatpush1.bf16.msra.mxu0 %v152
    %174 = vmatprep.subr.bf16.mxu0 0
    %175 = vmatpush1.bf16.msra.mxu0 %v153
    %176 = vmatprep.subr.bf16.mxu0 0
    %177 = vmatpush1.bf16.msra.mxu0 %v154
    %178 = vmatprep.subr.bf16.mxu0 0
    %179 = vmatpush1.bf16.msra.mxu0 %v155
    %180 = vmatprep.subr.bf16.mxu0 0
    %181 = vmatpush1.bf16.msra.mxu0 0
    %182 = vmatprep.subr.bf16.mxu0 0
    %183 = vmatpush1.bf16.msra.mxu0 0
    %184 = vmatprep.subr.bf16.mxu0 0
    %185 = vmatpush1.bf16.msra.mxu0 0
    %186 = vmatprep.subr.bf16.mxu0 0
    %187 = vmatpush1.bf16.msra.mxu0 0
    %188 = vmatprep.subr.bf16.mxu0 0
    %189 = vmatpush1.bf16.msra.mxu0 0
    %190 = vmatprep.subr.bf16.mxu0 0
    %191 = vmatpush1.bf16.msra.mxu0 0
    %192 = vmatprep.subr.bf16.mxu0 0
    %193 = vmatpush1.bf16.msra.mxu0 0
    %194 = vmatprep.subr.bf16.mxu0 0
    %195 = vmatpush1.bf16.msra.mxu0 0
    %196 = vmatprep.mubr.bf16.mxu0 0
    %197 = vmatmul.mubr.bf16.gmra.mrb[0].mxu0 %v99
    %v198 = vpop.f32.mrb[0].mxu0
    %v199 = vadd.f32 0.0, %v198
    %v200 = vpop.f32.mrb[0].mxu0
    %v201 = vpop.f32.mrb[0].mxu0
    %v202 = vpop.f32.mrb[0].mxu0
    %203 = vdwg.mxu0
    %204 = vst [vmem:[#allocation14] sm:$0xff] %v199
    %v205 = vpack.c.bf16 %v199, %v199
    %v206 = vld [vmem:[#allocation7] sm:$0xf]
    %v207 = vld [vmem:[#allocation7 + $0x4] sm:$0xf]
    %v208 = vld [vmem:[#allocation7 + $0x8] sm:$0xf]
    %v209 = vld [vmem:[#allocation7 + $0xc] sm:$0xf]
    %v210 = vld [vmem:[#allocation7 + $0x10] sm:$0xf]
    %v211 = vld [vmem:[#allocation7 + $0x14] sm:$0xf]
    %v212 = vld [vmem:[#allocation7 + $0x18] sm:$0xf]
    %v213 = vld [vmem:[#allocation7 + $0x1c] sm:$0xf]
    %v214 = vld [vmem:[#allocation7 + $0x20] sm:$0xf]
    %v215 = vld [vmem:[#allocation7 + $0x24] sm:$0xf]
    %v216 = vld [vmem:[#allocation7 + $0x28] sm:$0xf]
    %v217 = vld [vmem:[#allocation7 + $0x2c] sm:$0xf]
    %v218 = vld [vmem:[#allocation7 + $0x30] sm:$0xf]
    %v219 = vld [vmem:[#allocation7 + $0x34] sm:$0xf]
    %v220 = vld [vmem:[#allocation7 + $0x38] sm:$0xf]
    %v221 = vld [vmem:[#allocation7 + $0x3c] sm:$0xf]
    %v238 = vunpack.c.l.b16 %v206
    %v239 = vunpack.c.l.b16 %v207
    %v240 = vunpack.c.l.b16 %v208
    %v241 = vunpack.c.l.b16 %v209
    %v242 = vunpack.c.l.b16 %v210
    %v243 = vunpack.c.l.b16 %v211
    %v244 = vunpack.c.l.b16 %v212
    %v245 = vunpack.c.l.b16 %v213
    %v246 = vunpack.c.l.b16 %v214
    %v247 = vunpack.c.l.b16 %v215
    %v248 = vunpack.c.l.b16 %v216
    %v249 = vunpack.c.l.b16 %v217
    %v250 = vunpack.c.l.b16 %v218
    %v251 = vunpack.c.l.b16 %v219
    %v252 = vunpack.c.l.b16 %v220
    %v253 = vunpack.c.l.b16 %v221
    %v254 = vpack.c.b16 %v239, %v238
    %v255 = vpack.c.b16 %v241, %v240
    %v256 = vpack.c.b16 %v243, %v242
    %v257 = vpack.c.b16 %v245, %v244
    %v258 = vpack.c.b16 %v247, %v246
    %v259 = vpack.c.b16 %v249, %v248
    %v260 = vpack.c.b16 %v251, %v250
    %v261 = vpack.c.b16 %v253, %v252
    %270 = vmatprep.subr.bf16.mxu0 0
    %271 = vmatpush1.bf16.msra.mxu0 %v254
    %272 = vmatprep.subr.bf16.mxu0 0
    %273 = vmatpush1.bf16.msra.mxu0 %v255
    %274 = vmatprep.subr.bf16.mxu0 0
    %275 = vmatpush1.bf16.msra.mxu0 %v256
    %276 = vmatprep.subr.bf16.mxu0 0
    %277 = vmatpush1.bf16.msra.mxu0 %v257
    %278 = vmatprep.subr.bf16.mxu0 0
    %279 = vmatpush1.bf16.msra.mxu0 %v258
    %280 = vmatprep.subr.bf16.mxu0 0
    %281 = vmatpush1.bf16.msra.mxu0 %v259
    %282 = vmatprep.subr.bf16.mxu0 0
    %283 = vmatpush1.bf16.msra.mxu0 %v260
    %284 = vmatprep.subr.bf16.mxu0 0
    %285 = vmatpush1.bf16.msra.mxu0 %v261
    %286 = vmatprep.subr.bf16.mxu0 0
    %287 = vmatpush1.bf16.msra.mxu0 0
    %288 = vmatprep.subr.bf16.mxu0 0
    %289 = vmatpush1.bf16.msra.mxu0 0
    %290 = vmatprep.subr.bf16.mxu0 0
    %291 = vmatpush1.bf16.msra.mxu0 0
    %292 = vmatprep.subr.bf16.mxu0 0
    %293 = vmatpush1.bf16.msra.mxu0 0
    %294 = vmatprep.subr.bf16.mxu0 0
    %295 = vmatpush1.bf16.msra.mxu0 0
    %296 = vmatprep.subr.bf16.mxu0 0
    %297 = vmatpush1.bf16.msra.mxu0 0
    %298 = vmatprep.subr.bf16.mxu0 0
    %299 = vmatpush1.bf16.msra.mxu0 0
    %300 = vmatprep.subr.bf16.mxu0 0
    %301 = vmatpush1.bf16.msra.mxu0 0
    %302 = vmatprep.mubr.bf16.mxu0 0
    %303 = vmatmul.mubr.bf16.gmra.mrb[0].mxu0 %v205
    %v304 = vpop.f32.mrb[0].mxu0
    %v305 = vadd.f32 0.0, %v304
    %v306 = vpop.f32.mrb[0].mxu0
    %v307 = vpop.f32.mrb[0].mxu0
    %v308 = vpop.f32.mrb[0].mxu0
    %309 = vdwg.mxu0
    %v310 = vxor.u32 %v305, 2147483648
    %v311 = vmul.f32 %v310, 1.442695
    %v312 = vpow.pop %v311
    %v313 = vadd.f32 %v312, 1.0
    %v314 = vrcp.pop %v313
    %v315 = vmul.f32 1.0, %v314
    %316 = vst [vmem:[#allocation12] sm:$0xff] %v315
    %v317 = vld [vmem:[#allocation8] sm:$0xf]
    %v318 = vld [vmem:[#allocation8 + $0x4] sm:$0xf]
    %v319 = vld [vmem:[#allocation8 + $0x8] sm:$0xf]
    %v320 = vld [vmem:[#allocation8 + $0xc] sm:$0xf]
    %v321 = vld [vmem:[#allocation8 + $0x10] sm:$0xf]
    %v322 = vld [vmem:[#allocation8 + $0x14] sm:$0xf]
    %v323 = vld [vmem:[#allocation8 + $0x18] sm:$0xf]
    %v324 = vld [vmem:[#allocation8 + $0x1c] sm:$0xf]
    %v325 = vld [vmem:[#allocation8 + $0x20] sm:$0xf]
    %v326 = vld [vmem:[#allocation8 + $0x24] sm:$0xf]
    %v327 = vld [vmem:[#allocation8 + $0x28] sm:$0xf]
    %v328 = vld [vmem:[#allocation8 + $0x2c] sm:$0xf]
    %v329 = vld [vmem:[#allocation8 + $0x30] sm:$0xf]
    %v330 = vld [vmem:[#allocation8 + $0x34] sm:$0xf]
    %v331 = vld [vmem:[#allocation8 + $0x38] sm:$0xf]
    %v332 = vld [vmem:[#allocation8 + $0x3c] sm:$0xf]
    %v349 = vunpack.c.l.b16 %v317
    %v350 = vunpack.c.l.b16 %v318
    %v351 = vunpack.c.l.b16 %v319
    %v352 = vunpack.c.l.b16 %v320
    %v353 = vunpack.c.l.b16 %v321
    %v354 = vunpack.c.l.b16 %v322
    %v355 = vunpack.c.l.b16 %v323
    %v356 = vunpack.c.l.b16 %v324
    %v357 = vunpack.c.l.b16 %v325
    %v358 = vunpack.c.l.b16 %v326
    %v359 = vunpack.c.l.b16 %v327
    %v360 = vunpack.c.l.b16 %v328
    %v361 = vunpack.c.l.b16 %v329
    %v362 = vunpack.c.l.b16 %v330
    %v363 = vunpack.c.l.b16 %v331
    %v364 = vunpack.c.l.b16 %v332
    %v365 = vpack.c.b16 %v350, %v349
    %v366 = vpack.c.b16 %v352, %v351
    %v367 = vpack.c.b16 %v354, %v353
    %v368 = vpack.c.b16 %v356, %v355
    %v369 = vpack.c.b16 %v358, %v357
    %v370 = vpack.c.b16 %v360, %v359
    %v371 = vpack.c.b16 %v362, %v361
    %v372 = vpack.c.b16 %v364, %v363
    %381 = vmatprep.subr.bf16.mxu0 0
    %382 = vmatpush1.bf16.msra.mxu0 %v365
    %383 = vmatprep.subr.bf16.mxu0 0
    %384 = vmatpush1.bf16.msra.mxu0 %v366
    %385 = vmatprep.subr.bf16.mxu0 0
    %386 = vmatpush1.bf16.msra.mxu0 %v367
    %387 = vmatprep.subr.bf16.mxu0 0
    %388 = vmatpush1.bf16.msra.mxu0 %v368
    %389 = vmatprep.subr.bf16.mxu0 0
    %390 = vmatpush1.bf16.msra.mxu0 %v369
    %391 = vmatprep.subr.bf16.mxu0 0
    %392 = vmatpush1.bf16.msra.mxu0 %v370
    %393 = vmatprep.subr.bf16.mxu0 0
    %394 = vmatpush1.bf16.msra.mxu0 %v371
    %395 = vmatprep.subr.bf16.mxu0 0
    %396 = vmatpush1.bf16.msra.mxu0 %v372
    %397 = vmatprep.subr.bf16.mxu0 0
    %398 = vmatpush1.bf16.msra.mxu0 0
    %399 = vmatprep.subr.bf16.mxu0 0
    %400 = vmatpush1.bf16.msra.mxu0 0
    %401 = vmatprep.subr.bf16.mxu0 0
    %402 = vmatpush1.bf16.msra.mxu0 0
    %403 = vmatprep.subr.bf16.mxu0 0
    %404 = vmatpush1.bf16.msra.mxu0 0
    %405 = vmatprep.subr.bf16.mxu0 0
    %406 = vmatpush1.bf16.msra.mxu0 0
    %407 = vmatprep.subr.bf16.mxu0 0
    %408 = vmatpush1.bf16.msra.mxu0 0
    %409 = vmatprep.subr.bf16.mxu0 0
    %410 = vmatpush1.bf16.msra.mxu0 0
    %411 = vmatprep.subr.bf16.mxu0 0
    %412 = vmatpush1.bf16.msra.mxu0 0
    %413 = vmatprep.mubr.bf16.mxu0 0
    %414 = vmatmul.mubr.bf16.gmra.mrb[0].mxu0 %v205
    %v415 = vpop.f32.mrb[0].mxu0
    %v416 = vadd.f32 0.0, %v415
    %v417 = vpop.f32.mrb[0].mxu0
    %v418 = vpop.f32.mrb[0].mxu0
    %v419 = vpop.f32.mrb[0].mxu0
    %420 = vdwg.mxu0
    %v421 = vmul.f32 %v416, 0.5
    %v422 = vmul.f32 %v416, 0.70710677
    %v423 = verf.f32.pop %v422
    %v424 = vadd.f32 %v423, 1.0
    %v425 = vmul.f32 %v421, %v424
    %v426 = vpack.c.bf16 %v425, %v425
    %v427 = vld [vmem:[#allocation10] sm:$0xf]
    %v428 = vld [vmem:[#allocation10 + $0x4] sm:$0xf]
    %v429 = vld [vmem:[#allocation10 + $0x8] sm:$0xf]
    %v430 = vld [vmem:[#allocation10 + $0xc] sm:$0xf]
    %v431 = vld [vmem:[#allocation10 + $0x10] sm:$0xf]
    %v432 = vld [vmem:[#allocation10 + $0x14] sm:$0xf]
    %v433 = vld [vmem:[#allocation10 + $0x18] sm:$0xf]
    %v434 = vld [vmem:[#allocation10 + $0x1c] sm:$0xf]
    %v435 = vld [vmem:[#allocation10 + $0x20] sm:$0xf]
    %v436 = vld [vmem:[#allocation10 + $0x24] sm:$0xf]
    %v437 = vld [vmem:[#allocation10 + $0x28] sm:$0xf]
    %v438 = vld [vmem:[#allocation10 + $0x2c] sm:$0xf]
    %v439 = vld [vmem:[#allocation10 + $0x30] sm:$0xf]
    %v440 = vld [vmem:[#allocation10 + $0x34] sm:$0xf]
    %v441 = vld [vmem:[#allocation10 + $0x38] sm:$0xf]
    %v442 = vld [vmem:[#allocation10 + $0x3c] sm:$0xf]
    %v459 = vunpack.c.l.b16 %v427
    %v460 = vunpack.c.l.b16 %v428
    %v461 = vunpack.c.l.b16 %v429
    %v462 = vunpack.c.l.b16 %v430
    %v463 = vunpack.c.l.b16 %v431
    %v464 = vunpack.c.l.b16 %v432
    %v465 = vunpack.c.l.b16 %v433
    %v466 = vunpack.c.l.b16 %v434
    %v467 = vunpack.c.l.b16 %v435
    %v468 = vunpack.c.l.b16 %v436
    %v469 = vunpack.c.l.b16 %v437
    %v470 = vunpack.c.l.b16 %v438
    %v471 = vunpack.c.l.b16 %v439
    %v472 = vunpack.c.l.b16 %v440
    %v473 = vunpack.c.l.b16 %v441
    %v474 = vunpack.c.l.b16 %v442
    %v475 = vpack.c.b16 %v460, %v459
    %v476 = vpack.c.b16 %v462, %v461
    %v477 = vpack.c.b16 %v464, %v463
    %v478 = vpack.c.b16 %v466, %v465
    %v479 = vpack.c.b16 %v468, %v467
    %v480 = vpack.c.b16 %v470, %v469
    %v481 = vpack.c.b16 %v472, %v471
    %v482 = vpack.c.b16 %v474, %v473
    %491 = vmatprep.subr.bf16.mxu0 0
    %492 = vmatpush1.bf16.msra.mxu0 %v475
    %493 = vmatprep.subr.bf16.mxu0 0
    %494 = vmatpush1.bf16.msra.mxu0 %v476
    %495 = vmatprep.subr.bf16.mxu0 0
    %496 = vmatpush1.bf16.msra.mxu0 %v477
    %497 = vmatprep.subr.bf16.mxu0 0
    %498 = vmatpush1.bf16.msra.mxu0 %v478
    %499 = vmatprep.subr.bf16.mxu0 0
    %500 = vmatpush1.bf16.msra.mxu0 %v479
    %501 = vmatprep.subr.bf16.mxu0 0
    %502 = vmatpush1.bf16.msra.mxu0 %v480
    %503 = vmatprep.subr.bf16.mxu0 0
    %504 = vmatpush1.bf16.msra.mxu0 %v481
    %505 = vmatprep.subr.bf16.mxu0 0
    %506 = vmatpush1.bf16.msra.mxu0 %v482
    %507 = vmatprep.subr.bf16.mxu0 0
    %508 = vmatpush1.bf16.msra.mxu0 0
    %509 = vmatprep.subr.bf16.mxu0 0
    %510 = vmatpush1.bf16.msra.mxu0 0
    %511 = vmatprep.subr.bf16.mxu0 0
    %512 = vmatpush1.bf16.msra.mxu0 0
    %513 = vmatprep.subr.bf16.mxu0 0
    %514 = vmatpush1.bf16.msra.mxu0 0
    %515 = vmatprep.subr.bf16.mxu0 0
    %516 = vmatpush1.bf16.msra.mxu0 0
    %517 = vmatprep.subr.bf16.mxu0 0
    %518 = vmatpush1.bf16.msra.mxu0 0
    %519 = vmatprep.subr.bf16.mxu0 0
    %520 = vmatpush1.bf16.msra.mxu0 0
    %521 = vmatprep.subr.bf16.mxu0 0
    %522 = vmatpush1.bf16.msra.mxu0 0
    %523 = vmatprep.mubr.bf16.mxu0 0
    %524 = vmatmul.mubr.bf16.gmra.mrb[0].mxu0 %v426
    %v525 = vpop.f32.mrb[0].mxu0
    %v526 = vadd.f32 0.0, %v525
    %v527 = vpop.f32.mrb[0].mxu0
    %v528 = vpop.f32.mrb[0].mxu0
    %v529 = vpop.f32.mrb[0].mxu0
    %530 = vdwg.mxu0
    %v531 = vadd.f32 %v416, %v526
    %532 = vadd.xlane.f32.xlu0 %v531
    %v533 = vpop.xlane.xlu0 %532
    %v534 = vmul.f32 %v533, 0.03125
    %v535 = vmul.f32 %v531, %v531
    %536 = vadd.xlane.f32.xlu0 %v535
    %v537 = vpop.xlane.xlu0 %536
    %v538 = vmul.f32 %v537, 0.03125
    %v539 = vmul.f32 %v534, %v534
    %v540 = vsub.f32 %v538, %v539
    %v541 = vmax.f32 %v540, 0.0
    %v542 = vsub.f32 %v531, %v534
    %v543 = vadd.f32 %v541, 1e-05
    %v544 = vrsqrt.pop %v543
    %v545 = vmul.f32 %v542, %v544
    %v546 = vld [vmem:[%s5] sm:$0x1]
    %v548 = vlaneseq
    %v549 = vshrl.u32 %v548, 7
    %v550 = vsub.s32 0, %v549
    %v551 = vrot.slane %v546, %v550
    %v553 = vmul.f32 %v545, %v551
    %v554 = vld [vmem:[%s6] sm:$0x1]
    %v556 = vlaneseq
    %v557 = vshrl.u32 %v556, 7
    %v558 = vsub.s32 0, %v557
    %v559 = vrot.slane %v554, %v558
    %v561 = vadd.f32 %v553, %v559
    %562 = vst [vmem:[#allocation11] sm:$0xff] %v561
    // Predicated region
    $region50: #{tpu_custom_call.1} parent=1 // pred_check
      _
    $region51: #{tpu_custom_call.1} parent=1 // pred_check_branch
      %564 = sbr.rel (0) target = $region53
    $region52: #{tpu_custom_call.1} parent=1 // pred_region
      %s566 = ssub.s32 128, 128
      %567 = vsyncadd [#allocation4], %s566
      %s569 = sshll.u32 [#allocation11], 4
      %s570 = int_to_ptr.vmem [resolvable:$true] %s569
      %572 = dma.vmem_to_hbm [thread:$0]  %s570, 128, %s7, [#allocation4]
    $region53: #{tpu_custom_call.1} parent=1 // pred_fallthru
      _
    // Predicated region
    $region54: #{tpu_custom_call.1} parent=1 // pred_check
      _
    $region55: #{tpu_custom_call.1} parent=1 // pred_check_branch
      %574 = sbr.rel (0) target = $region57
    $region56: #{tpu_custom_call.1} parent=1 // pred_region
      %s576 = ssub.s32 128, 128
      %577 = vsyncadd [#allocation13], %s576
      %s579 = sshll.u32 [#allocation12], 4
      %s580 = int_to_ptr.vmem [resolvable:$true] %s579
      %582 = dma.vmem_to_hbm [thread:$0]  %s580, 128, %s8, [#allocation13]
    $region57: #{tpu_custom_call.1} parent=1 // pred_fallthru
      _
    // Predicated region
    $region58: #{tpu_custom_call.1} parent=1 // pred_check
      _
    $region59: #{tpu_custom_call.1} parent=1 // pred_check_branch
      %584 = sbr.rel (0) target = $region61
    $region60: #{tpu_custom_call.1} parent=1 // pred_region
      %s586 = ssub.s32 128, 128
      %587 = vsyncadd [#allocation13], %s586
      %s589 = sshll.u32 [#allocation14], 4
      %s590 = int_to_ptr.vmem [resolvable:$true] %s589
      %592 = dma.vmem_to_hbm [thread:$0]  %s590, 128, %s9, [#allocation13]
    $region61: #{tpu_custom_call.1} parent=1 // pred_fallthru
      _
    // Predicated region
    $region62: #{tpu_custom_call.1} parent=1 // pred_check
      _
    $region63: #{tpu_custom_call.1} parent=1 // pred_check_branch
      %594 = sbr.rel (0) target = $region65
    $region64: #{tpu_custom_call.1} parent=1 // pred_region
      %595 = dma.done [#allocation4], 128
    $region65: #{tpu_custom_call.1} parent=1 // pred_fallthru
      _
    // Predicated region
    $region66: #{tpu_custom_call.1} parent=1 // pred_check
      _
    $region67: #{tpu_custom_call.1} parent=1 // pred_check_branch
      %597 = sbr.rel (0) target = $region69
    $region68: #{tpu_custom_call.1} parent=1 // pred_region
      %598 = dma.done [#allocation13], 128
    $region69: #{tpu_custom_call.1} parent=1 // pred_fallthru
      _
    // Predicated region
    $region70: #{tpu_custom_call.1} parent=1 // pred_check
      _
    $region71: #{tpu_custom_call.1} parent=1 // pred_check_branch
      %600 = sbr.rel (0) target = $region73
    $region72: #{tpu_custom_call.1} parent=1 // pred_region
      %601 = dma.done [#allocation13], 128
    $region73: #{tpu_custom_call.1} parent=1 // pred_fallthru
      _
    %602 = vsyncpa [#allocation3], 1
    %603 = vsyncpa [#allocation6], 1
    %604 = vsyncpa [#allocation9], 1
    %605 = vsyncpa [#allocation4], 1
    %606 = vsyncpa [#allocation13], 1

</llo_original>
